<compile_context>
chip_gen: v7x
topology: tpu7x:2x2x1
jax: 0.10.0
libtpu: 0.0.40
codegen_flags: <defaults>
</compile_context>

<pallas_src>
import functools
import math

import jax
import jax.numpy as jnp
from jax.experimental import pallas as pl
from jax.experimental.pallas import tpu as pltpu


# ----------------------------------------------------------------------------
# config (toy BERT; same structure as bert-base, tiny sizes)
# ----------------------------------------------------------------------------
CFG = dict(
    vocab_size=100,
    max_pos=32,
    type_vocab=2,
    hidden=32,        # emb_dim
    heads=2,
    layers=2,
    intermediate=64,
    output_dim=2,
    seq=8,
    batch=2,
)

MXU_DTYPE = jnp.bfloat16      # MXU operand dtype (accumulate stays f32)
LN_EPS = 1e-12

# packed per-layer vector rows (all width H, padded to 8 sublanes)
_ROW_BO, _ROW_LN1G, _ROW_LN1B, _ROW_B2, _ROW_LN2G, _ROW_LN2B = range(6)
# packed global vector rows (all width H, padded to 8 sublanes)
_ROW_EG, _ROW_EB, _ROW_POOLB = range(3)


# ----------------------------------------------------------------------------
# math helpers (plain jnp; traced both into the kernel and the JAX reference)
# ----------------------------------------------------------------------------
def _erf(x):
    # Abramowitz & Stegun 7.1.26 (max abs err ~1.5e-7): exact-erf GELU without
    # needing a lax.erf lowering inside Mosaic (only exp / mul / add / select).
    a1, a2, a3, a4, a5 = 0.254829592, -0.284496736, 1.421413741, -1.453152027, 1.061405429
    p = 0.3275911
    ax = jnp.abs(x)
    t = 1.0 / (1.0 + p * ax)
    poly = ((((a5 * t + a4) * t + a3) * t + a2) * t + a1) * t
    y = 1.0 - poly * jnp.exp(-ax * ax)
    return jnp.where(x >= 0, y, -y)


def _gelu(x):
    # exact-erf GELU (PyTorch / pretrained BERT default), not the tanh approx.
    return 0.5 * x * (1.0 + _erf(x * 0.7071067811865476))


def _layer_norm(x, g, b):
    mean = jnp.mean(x, axis=-1, keepdims=True)
    var = jnp.mean(jnp.square(x - mean), axis=-1, keepdims=True)
    return (x - mean) * jax.lax.rsqrt(var + LN_EPS) * g + b


def _mm(a, b):
    # a @ b on the MXU: bf16 operands, f32 accumulate.
    return jnp.dot(a.astype(MXU_DTYPE), b.astype(MXU_DTYPE),
                   preferred_element_type=jnp.float32)


def _mm_t(a, b):
    # a @ b.T on the MXU (contract the last dims of both), bf16 operands.
    return jax.lax.dot_general(
        a.astype(MXU_DTYPE), b.astype(MXU_DTYPE),
        dimension_numbers=(((1,), (1,)), ((), ())),
        preferred_element_type=jnp.float32)


# ----------------------------------------------------------------------------
# the fused kernel: one grid step == one encoder layer; layer 0 also applies
# the embedding LayerNorm, the last layer also runs pooler + classifier.
# ----------------------------------------------------------------------------
def _bert_cls_kernel(
        emb_ref, gvec_ref,
        wqkv_ref, bqkv_ref, wo_ref,
        w1_ref, b1_ref, w2_ref, lvec_ref,
        poolw_ref, fcw_ref, fcb_ref,
        logits_ref,
        h_ref,
        *, batch, seq, hidden, heads):
    B, S, H, NH = batch, seq, hidden, heads
    DH = H // NH
    scale = 1.0 / math.sqrt(DH)          # Python float -> jaxpr literal
    layer = pl.program_id(0)

    # ---- first grid step: embedding LayerNorm into the resident hidden state
    @pl.when(layer == 0)
    def _():
        h_ref[...] = _layer_norm(emb_ref[...],
                                 gvec_ref[_ROW_EG:_ROW_EG + 1, :],
                                 gvec_ref[_ROW_EB:_ROW_EB + 1, :])

    h = h_ref[...]                                        # (B*S, H) f32, VMEM-resident

    # ---- fused QKV projection: one (H, 3H) matmul instead of three ---------
    qkv = _mm(h, wqkv_ref[...]) + bqkv_ref[...]           # (B*S, 3H) f32
    q = qkv[:, :H] * scale                                # pre-scale q (N*S*Dh ops, not N*S*S)
    k = qkv[:, H:2 * H]
    v = qkv[:, 2 * H:]

    # ---- multi-head self-attention on contiguous head column slices --------
    # (all-ones attention mask / zero token-type ids: the bert(x) defaults,
    #  so no masking is required)
    rows = []
    for b in range(B):
        r0 = b * S
        head_out = []
        for hh in range(NH):
            c0 = hh * DH
            qb = q[r0:r0 + S, c0:c0 + DH]                 # (S, DH)
            kb = k[r0:r0 + S, c0:c0 + DH]
            vb = v[r0:r0 + S, c0:c0 + DH]
            s = _mm_t(qb, kb)                             # (S, S) f32
            s = s - jnp.max(s, axis=-1, keepdims=True)
            p = jnp.exp(s)
            p = p * pl.reciprocal(jnp.sum(p, axis=-1, keepdims=True), approx=True)
            head_out.append(_mm(p, vb))                   # (S, DH)
        rows.append(jnp.concatenate(head_out, axis=1))    # (S, H)
    ctx = jnp.concatenate(rows, axis=0)                   # (B*S, H)

    # ---- attention output projection + residual + LN1 (fused epilogue) -----
    attn = _mm(ctx, wo_ref[...]) + lvec_ref[_ROW_BO:_ROW_BO + 1, :]
    h1 = _layer_norm(attn + h,
                     lvec_ref[_ROW_LN1G:_ROW_LN1G + 1, :],
                     lvec_ref[_ROW_LN1B:_ROW_LN1B + 1, :])

    # ---- FFN (exact GELU) + residual + LN2 (fused epilogue) ----------------
    inter = _gelu(_mm(h1, w1_ref[...]) + b1_ref[...])
    ffn = _mm(inter, w2_ref[...]) + lvec_ref[_ROW_B2:_ROW_B2 + 1, :]
    h_ref[...] = _layer_norm(ffn + h1,
                             lvec_ref[_ROW_LN2G:_ROW_LN2G + 1, :],
                             lvec_ref[_ROW_LN2B:_ROW_LN2B + 1, :])

    # ---- last grid step: BERT pooler (tanh of dense on [CLS]) + classifier -
    @pl.when(layer == pl.num_programs(0) - 1)
    def _():
        hf = h_ref[...]
        cls = jnp.concatenate([hf[b * S:b * S + 1, :] for b in range(B)], axis=0)  # (B, H)
        pooled = jnp.tanh(_mm(cls, poolw_ref[...])
                          + gvec_ref[_ROW_POOLB:_ROW_POOLB + 1, :])                # bert(x)[1]
        logits_ref[...] = (_mm(pooled, fcw_ref[...]) + fcb_ref[...]).astype(logits_ref.dtype)


# ----------------------------------------------------------------------------
# one-time parameter packing (stacking / concatenation hoisted out of the
# per-call path)
# ----------------------------------------------------------------------------
def pack_params(params, cfg):
    H, O = cfg["hidden"], cfg["output_dim"]
    zeros_h = jnp.zeros((H,), jnp.float32)
    Ls = params["layers"]
    return dict(
        word_emb=params["word_emb"].astype(jnp.float32),
        pos_emb=params["pos_emb"].astype(jnp.float32),
        type_emb=params["type_emb"].astype(jnp.float32),
        # global width-H vectors packed into one sublane-aligned (8, H) block
        gvec=jnp.stack([params["emb_ln_g"], params["emb_ln_b"], params["pool_b"],
                        zeros_h, zeros_h, zeros_h, zeros_h, zeros_h], axis=0),
        wqkv=jnp.stack([jnp.concatenate([lp["wq"], lp["wk"], lp["wv"]], axis=1)
                        for lp in Ls]),                                    # (L, H, 3H)
        bqkv=jnp.stack([jnp.concatenate([lp["bq"], lp["bk"], lp["bv"]])[None, :]
                        for lp in Ls]),                                    # (L, 1, 3H)
        wo=jnp.stack([lp["wo"] for lp in Ls]),                             # (L, H, H)
        w1=jnp.stack([lp["w1"] for lp in Ls]),                             # (L, H, I)
        b1=jnp.stack([lp["b1"][None, :] for lp in Ls]),                    # (L, 1, I)
        w2=jnp.stack([lp["w2"] for lp in Ls]),                             # (L, I, H)
        # per-layer width-H vectors packed into one (L, 8, H) block
        lvec=jnp.stack([jnp.stack([lp["bo"], lp["ln1_g"], lp["ln1_b"],
                                   lp["b2"], lp["ln2_g"], lp["ln2_b"],
                                   zeros_h, zeros_h], axis=0)
                        for lp in Ls]),                                    # (L, 8, H)
        pool_w=params["pool_w"],                                           # (H, H)
        fc_w=params["fc_w"],                                               # (H, O)
        fc_b=params["fc_b"].reshape(1, O),                                 # (1, O)
    )


# ----------------------------------------------------------------------------
# wrapper: embedding gathers + the single pallas_call (jit-friendly)
# ----------------------------------------------------------------------------
def sentence_classification_forward(packed, x, *, heads):
    """Equivalent of: self.fc(self.bert(x)[1])."""
    B, S = x.shape
    L, _, H = packed["wo"].shape
    O = packed["fc_w"].shape[-1]

    # --- plain-JAX glue: embedding lookups (token_type_ids = 0) ------------
    emb = (packed["word_emb"][x]
           + packed["pos_emb"][:S][None, :, :]
           + packed["type_emb"][0][None, None, :]).reshape(B * S, H).astype(jnp.float32)

    def full_block(a):
        # whole array as one block; constant index -> fetched once, stays VMEM-resident
        return pl.BlockSpec(a.shape, lambda l: (0,) * a.ndim)

    def per_layer(a):
        # select layer l's slice and squeeze the leading layer axis;
        # layer l+1 is prefetched while layer l computes (auto double-buffering)
        return pl.BlockSpec((None,) + a.shape[1:], lambda l: (l,) + (0,) * (a.ndim - 1))

    kernel = functools.partial(_bert_cls_kernel, batch=B, seq=S, hidden=H, heads=heads)

    return pl.pallas_call(
        kernel,
        out_shape=jax.ShapeDtypeStruct((B, O), jnp.float32),
        grid=(L,),
        in_specs=[
            full_block(emb), full_block(packed["gvec"]),
            per_layer(packed["wqkv"]), per_layer(packed["bqkv"]), per_layer(packed["wo"]),
            per_layer(packed["w1"]), per_layer(packed["b1"]), per_layer(packed["w2"]),
            per_layer(packed["lvec"]),
            full_block(packed["pool_w"]), full_block(packed["fc_w"]), full_block(packed["fc_b"]),
        ],
        out_specs=pl.BlockSpec((B, O), lambda l: (0, 0)),
        scratch_shapes=[pltpu.VMEM((B * S, H), jnp.float32)],   # resident hidden state
        compiler_params=pltpu.CompilerParams(
            dimension_semantics=("arbitrary",)),                # layers are sequential
    )(emb, packed["gvec"], packed["wqkv"], packed["bqkv"], packed["wo"],
      packed["w1"], packed["b1"], packed["w2"], packed["lvec"],
      packed["pool_w"], packed["fc_w"], packed["fc_b"])


# ----------------------------------------------------------------------------
# pure-JAX reference (same math / same bf16 MXU-operand casts) for validation
# ----------------------------------------------------------------------------
def _reference_forward(params, x, cfg):
    B, S = x.shape
    H, NH = cfg["hidden"], cfg["heads"]
    DH = H // NH
    scale = 1.0 / math.sqrt(DH)

    emb = (params["word_emb"][x]
           + params["pos_emb"][:S][None, :, :]
           + params["type_emb"][0][None, None, :]).reshape(B * S, H)
    h = _layer_norm(emb, params["emb_ln_g"][None, :], params["emb_ln_b"][None, :])

    for lp in params["layers"]:
        wqkv = jnp.concatenate([lp["wq"], lp["wk"], lp["wv"]], axis=1)
        bqkv = jnp.concatenate([lp["bq"], lp["bk"], lp["bv"]])
        qkv = _mm(h, wqkv) + bqkv[None, :]
        q = (qkv[:, :H] * scale).reshape(B, S, NH, DH).transpose(0, 2, 1, 3)
        k = qkv[:, H:2 * H].reshape(B, S, NH, DH).transpose(0, 2, 1, 3)
        v = qkv[:, 2 * H:].reshape(B, S, NH, DH).transpose(0, 2, 1, 3)
        s = jnp.einsum("bhqd,bhkd->bhqk", q.astype(MXU_DTYPE), k.astype(MXU_DTYPE),
                       preferred_element_type=jnp.float32)
        p = jax.nn.softmax(s, axis=-1)
        ctx = jnp.einsum("bhqk,bhkd->bhqd", p.astype(MXU_DTYPE), v.astype(MXU_DTYPE),
                         preferred_element_type=jnp.float32)
        ctx = ctx.transpose(0, 2, 1, 3).reshape(B * S, H)
        attn = _mm(ctx, lp["wo"]) + lp["bo"][None, :]
        h1 = _layer_norm(attn + h, lp["ln1_g"][None, :], lp["ln1_b"][None, :])
        inter = _gelu(_mm(h1, lp["w1"]) + lp["b1"][None, :])
        ffn = _mm(inter, lp["w2"]) + lp["b2"][None, :]
        h = _layer_norm(ffn + h1, lp["ln2_g"][None, :], lp["ln2_b"][None, :])

    cls = h.reshape(B, S, H)[:, 0, :]
    pooled = jnp.tanh(_mm(cls, params["pool_w"]) + params["pool_b"][None, :])
    return _mm(pooled, params["fc_w"]) + params["fc_b"][None, :]


# ----------------------------------------------------------------------------
# deterministic synthetic parameters (stand-in for pretrained bert-base)
# ----------------------------------------------------------------------------
def init_params(key, cfg):
    std = 0.02
    keys = iter(jax.random.split(key, 64))

    def nrm(shape):
        return std * jax.random.normal(next(keys), shape, dtype=jnp.float32)

    H, I = cfg["hidden"], cfg["intermediate"]
    p = {
        "word_emb": nrm((cfg["vocab_size"], H)),
        "pos_emb": nrm((cfg["max_pos"], H)),
        "type_emb": nrm((cfg["type_vocab"], H)),
        "emb_ln_g": jnp.ones((H,), jnp.float32),
        "emb_ln_b": jnp.zeros((H,), jnp.float32),
        "layers": [],
        "pool_w": nrm((H, H)),
        "pool_b": jnp.zeros((H,), jnp.float32),
        "fc_w": nrm((H, cfg["output_dim"])),
        "fc_b": jnp.zeros((cfg["output_dim"],), jnp.float32),
    }
    for _ in range(cfg["layers"]):
        p["layers"].append({
            "wq": nrm((H, H)), "bq": jnp.zeros((H,), jnp.float32),
            "wk": nrm((H, H)), "bk": jnp.zeros((H,), jnp.float32),
            "wv": nrm((H, H)), "bv": jnp.zeros((H,), jnp.float32),
            "wo": nrm((H, H)), "bo": jnp.zeros((H,), jnp.float32),
            "ln1_g": jnp.ones((H,), jnp.float32),
            "ln1_b": jnp.zeros((H,), jnp.float32),
            "w1": nrm((H, I)), "b1": jnp.zeros((I,), jnp.float32),
            "w2": nrm((I, H)), "b2": jnp.zeros((H,), jnp.float32),
            "ln2_g": jnp.ones((H,), jnp.float32),
            "ln2_b": jnp.zeros((H,), jnp.float32),
        })
    return p


if __name__ == "__main__":
    key = jax.random.PRNGKey(0)
    pkey, xkey = jax.random.split(key)

    params = init_params(pkey, CFG)
    x = jax.random.randint(
        xkey, (CFG["batch"], CFG["seq"]), minval=0, maxval=CFG["vocab_size"],
        dtype=jnp.int32)

    # one-time packing + jitted forward (embedding gather + single pallas_call)
    packed = pack_params(params, CFG)
    forward = jax.jit(functools.partial(sentence_classification_forward, heads=CFG["heads"]))

    logits = forward(packed, x)
    jax.block_until_ready(logits)
    assert logits.shape == (CFG["batch"], CFG["output_dim"])
    assert bool(jnp.all(jnp.isfinite(logits)))

    # validate against a pure-JAX reference using identical numerics
    ref = _reference_forward(params, x, CFG)
    err = float(jnp.max(jnp.abs(logits - ref)))
    denom = float(jnp.max(jnp.abs(ref)))
    assert err <= 5e-2 * denom + 1e-5, f"mismatch: max|diff|={err}, max|ref|={denom}"

    # TODO(synk): at real BERT sizes (H=768, S=512) this single-kernel layout
    # should be split into tiled flash-attention + K-accumulated matmul kernels;
    # at the toy shapes here launch overhead dominates, so whole-model fusion
    # is the right structure.
    print("KERNEL_OK")
</pallas_src>

<mosaic_0001>
module attributes {stable_mosaic.version = 11 : i64} {
  func.func @_bert_cls_kernel(%arg0: i32, %arg1: memref<16x32xf32, #tpu.memory_space<vmem>>, %arg2: memref<8x32xf32, #tpu.memory_space<vmem>>, %arg3: memref<1x32x96xf32, #tpu.memory_space<vmem>>, %arg4: memref<1x1x96xf32, #tpu.memory_space<vmem>>, %arg5: memref<1x32x32xf32, #tpu.memory_space<vmem>>, %arg6: memref<1x32x64xf32, #tpu.memory_space<vmem>>, %arg7: memref<1x1x64xf32, #tpu.memory_space<vmem>>, %arg8: memref<1x64x32xf32, #tpu.memory_space<vmem>>, %arg9: memref<1x8x32xf32, #tpu.memory_space<vmem>>, %arg10: memref<32x32xf32, #tpu.memory_space<vmem>>, %arg11: memref<32x2xf32, #tpu.memory_space<vmem>>, %arg12: memref<1x2xf32, #tpu.memory_space<vmem>>, %arg13: memref<2x2xf32, #tpu.memory_space<vmem>>, %arg14: memref<16x32xf32, #tpu.memory_space<vmem>>) attributes {dimension_semantics = [#tpu.dimension_semantics<arbitrary>], iteration_bounds = array<i64: 2>, scalar_prefetch = 0 : i64, scratch_operands = 1 : i64, tpu.core_type = #tpu.core_type<tc>, window_params = [{pipeline_mode = #tpu.pipeline_mode<synchronous>, transform_indices = @transform_0, window_bounds = array<i64: 16, 32>}, {pipeline_mode = #tpu.pipeline_mode<synchronous>, transform_indices = @transform_1, window_bounds = array<i64: 8, 32>}, {transform_indices = @transform_2, window_bounds = array<i64: 1, 32, 96>}, {transform_indices = @transform_3, window_bounds = array<i64: 1, 1, 96>}, {transform_indices = @transform_4, window_bounds = array<i64: 1, 32, 32>}, {transform_indices = @transform_5, window_bounds = array<i64: 1, 32, 64>}, {transform_indices = @transform_6, window_bounds = array<i64: 1, 1, 64>}, {transform_indices = @transform_7, window_bounds = array<i64: 1, 64, 32>}, {transform_indices = @transform_8, window_bounds = array<i64: 1, 8, 32>}, {pipeline_mode = #tpu.pipeline_mode<synchronous>, transform_indices = @transform_9, window_bounds = array<i64: 32, 32>}, {pipeline_mode = #tpu.pipeline_mode<synchronous>, transform_indices = @transform_10, window_bounds = array<i64: 32, 2>}, {pipeline_mode = #tpu.pipeline_mode<synchronous>, transform_indices = @transform_11, window_bounds = array<i64: 1, 2>}, {pipeline_mode = #tpu.pipeline_mode<synchronous>, transform_indices = @transform_12, window_bounds = array<i64: 2, 2>}]} {
    %c0_i32 = arith.constant 0 : i32
    %0 = arith.cmpi eq, %arg0, %c0_i32 : i32
    %1 = arith.extui %0 : i1 to i32
    %c0_i32_0 = arith.constant 0 : i32
    %2 = arith.cmpi ne, %1, %c0_i32_0 : i32
    scf.if %2 {
      %c0_81 = arith.constant 0 : index
      %c0_82 = arith.constant 0 : index
      %222 = vector.load %arg1[%c0_81, %c0_82] : memref<16x32xf32, #tpu.memory_space<vmem>>, vector<16x32xf32>
      %c0_83 = arith.constant 0 : index
      %c0_84 = arith.constant 0 : index
      %223 = vector.load %arg2[%c0_83, %c0_84] : memref<8x32xf32, #tpu.memory_space<vmem>>, vector<1x32xf32>
      %c1_85 = arith.constant 1 : index
      %c0_86 = arith.constant 0 : index
      %224 = vector.load %arg2[%c1_85, %c0_86] : memref<8x32xf32, #tpu.memory_space<vmem>>, vector<1x32xf32>
      %cst_87 = arith.constant dense<0.000000e+00> : vector<16xf32>
      %225 = vector.multi_reduction <add>, %222, %cst_87 [1] : vector<16x32xf32> to vector<16xf32>
      %226 = vector.shape_cast %225 : vector<16xf32> to vector<16x1xf32>
      %cst_88 = arith.constant 3.200000e+01 : f32
      %227 = vector.broadcast %cst_88 : f32 to vector<16x1xf32>
      %228 = arith.divf %226, %227 : vector<16x1xf32>
      %229 = vector.broadcast %228 : vector<16x1xf32> to vector<16x32xf32>
      %230 = arith.subf %222, %229 : vector<16x32xf32>
      %231 = arith.mulf %230, %230 : vector<16x32xf32>
      %cst_89 = arith.constant dense<0.000000e+00> : vector<16xf32>
      %232 = vector.multi_reduction <add>, %231, %cst_89 [1] : vector<16x32xf32> to vector<16xf32>
      %233 = vector.shape_cast %232 : vector<16xf32> to vector<16x1xf32>
      %cst_90 = arith.constant 3.200000e+01 : f32
      %234 = vector.broadcast %cst_90 : f32 to vector<16x1xf32>
      %235 = arith.divf %233, %234 : vector<16x1xf32>
      %236 = vector.broadcast %228 : vector<16x1xf32> to vector<16x32xf32>
      %237 = arith.subf %222, %236 : vector<16x32xf32>
      %cst_91 = arith.constant 9.99999996E-13 : f32
      %238 = vector.broadcast %cst_91 : f32 to vector<16x1xf32>
      %239 = arith.addf %235, %238 : vector<16x1xf32>
      %240 = math.rsqrt %239 : vector<16x1xf32>
      %241 = vector.broadcast %240 : vector<16x1xf32> to vector<16x32xf32>
      %242 = arith.mulf %237, %241 : vector<16x32xf32>
      %243 = vector.broadcast %223 : vector<1x32xf32> to vector<16x32xf32>
      %244 = arith.mulf %242, %243 : vector<16x32xf32>
      %245 = vector.broadcast %224 : vector<1x32xf32> to vector<16x32xf32>
      %246 = arith.addf %244, %245 : vector<16x32xf32>
      %c0_92 = arith.constant 0 : index
      %c0_93 = arith.constant 0 : index
      %247 = vector.load %arg14[%c0_92, %c0_93] : memref<16x32xf32, #tpu.memory_space<vmem>>, vector<16x32xf32>
      tpu.vector_store %arg14[%c0_92, %c0_93], %246 {strides = array<i32>} : memref<16x32xf32, #tpu.memory_space<vmem>>, vector<16x32xf32>,
    } else {
    }
    %c0 = arith.constant 0 : index
    %c0_1 = arith.constant 0 : index
    %3 = vector.load %arg14[%c0, %c0_1] : memref<16x32xf32, #tpu.memory_space<vmem>>, vector<16x32xf32>
    %c0_2 = arith.constant 0 : index
    %c0_3 = arith.constant 0 : index
    %c0_4 = arith.constant 0 : index
    %4 = vector.load %arg3[%c0_2, %c0_3, %c0_4] : memref<1x32x96xf32, #tpu.memory_space<vmem>>, vector<1x32x96xf32>
    %5 = vector.shape_cast %4 : vector<1x32x96xf32> to vector<32x96xf32>
    %6 = arith.truncf %3 : vector<16x32xf32> to vector<16x32xbf16>
    %7 = arith.truncf %5 : vector<32x96xf32> to vector<32x96xbf16>
    %cst = arith.constant dense<0.000000e+00> : vector<16x96xf32>
    %8 = tpu.matmul %6, %7, %cst {dimension_numbers = #tpu.dot_dimension_numbers<[1], [0], [0], [1], [0, 0, 1, 1], [], []>} : vector<16x32xbf16>, vector<32x96xbf16>, vector<16x96xf32> -> vector<16x96xf32>
    %c0_5 = arith.constant 0 : index
    %c0_6 = arith.constant 0 : index
    %c0_7 = arith.constant 0 : index
    %9 = vector.load %arg4[%c0_5, %c0_6, %c0_7] : memref<1x1x96xf32, #tpu.memory_space<vmem>>, vector<1x1x96xf32>
    %10 = vector.shape_cast %9 : vector<1x1x96xf32> to vector<1x96xf32>
    %11 = vector.broadcast %10 : vector<1x96xf32> to vector<16x96xf32>
    %12 = arith.addf %8, %11 : vector<16x96xf32>
    %13 = vector.extract_strided_slice %12 {offsets = [0, 0], sizes = [16, 32], strides = [1, 1]} : vector<16x96xf32> to vector<16x32xf32>
    %cst_8 = arith.constant 2.500000e-01 : f32
    %14 = vector.broadcast %cst_8 : f32 to vector<16x32xf32>
    %15 = arith.mulf %13, %14 : vector<16x32xf32>
    %16 = vector.extract_strided_slice %12 {offsets = [0, 32], sizes = [16, 32], strides = [1, 1]} : vector<16x96xf32> to vector<16x32xf32>
    %17 = vector.extract_strided_slice %12 {offsets = [0, 64], sizes = [16, 32], strides = [1, 1]} : vector<16x96xf32> to vector<16x32xf32>
    %18 = vector.extract_strided_slice %15 {offsets = [0, 0], sizes = [8, 16], strides = [1, 1]} : vector<16x32xf32> to vector<8x16xf32>
    %19 = vector.extract_strided_slice %16 {offsets = [0, 0], sizes = [8, 16], strides = [1, 1]} : vector<16x32xf32> to vector<8x16xf32>
    %20 = vector.extract_strided_slice %17 {offsets = [0, 0], sizes = [8, 16], strides = [1, 1]} : vector<16x32xf32> to vector<8x16xf32>
    %21 = arith.truncf %18 : vector<8x16xf32> to vector<8x16xbf16>
    %22 = arith.truncf %19 : vector<8x16xf32> to vector<8x16xbf16>
    %cst_9 = arith.constant dense<0.000000e+00> : vector<8x8xf32>
    %23 = tpu.matmul %21, %22, %cst_9 {dimension_numbers = #tpu.dot_dimension_numbers<[1], [1], [0], [0], [0, 0, 1, 0], [], []>} : vector<8x16xbf16>, vector<8x16xbf16>, vector<8x8xf32> -> vector<8x8xf32>
    %cst_10 = arith.constant dense<0xFF800000> : vector<8xf32>
    %24 = vector.multi_reduction <maximumf>, %23, %cst_10 [1] : vector<8x8xf32> to vector<8xf32>
    %25 = vector.shape_cast %24 : vector<8xf32> to vector<8x1xf32>
    %26 = vector.broadcast %25 : vector<8x1xf32> to vector<8x8xf32>
    %27 = arith.subf %23, %26 : vector<8x8xf32>
    %28 = math.exp %27 : vector<8x8xf32>
    %cst_11 = arith.constant dense<0.000000e+00> : vector<8xf32>
    %29 = vector.multi_reduction <add>, %28, %cst_11 [1] : vector<8x8xf32> to vector<8xf32>
    %30 = vector.shape_cast %29 : vector<8xf32> to vector<8x1xf32>
    %31 = tpu.reciprocal %30 {approx = true} : vector<8x1xf32> -> vector<8x1xf32>
    %32 = vector.broadcast %31 : vector<8x1xf32> to vector<8x8xf32>
    %33 = arith.mulf %28, %32 : vector<8x8xf32>
    %34 = arith.truncf %33 : vector<8x8xf32> to vector<8x8xbf16>
    %35 = arith.truncf %20 : vector<8x16xf32> to vector<8x16xbf16>
    %cst_12 = arith.constant dense<0.000000e+00> : vector<8x16xf32>
    %36 = tpu.matmul %34, %35, %cst_12 {dimension_numbers = #tpu.dot_dimension_numbers<[1], [0], [0], [1], [0, 0, 1, 1], [], []>} : vector<8x8xbf16>, vector<8x16xbf16>, vector<8x16xf32> -> vector<8x16xf32>
    %37 = vector.extract_strided_slice %15 {offsets = [0, 16], sizes = [8, 16], strides = [1, 1]} : vector<16x32xf32> to vector<8x16xf32>
    %38 = vector.extract_strided_slice %16 {offsets = [0, 16], sizes = [8, 16], strides = [1, 1]} : vector<16x32xf32> to vector<8x16xf32>
    %39 = vector.extract_strided_slice %17 {offsets = [0, 16], sizes = [8, 16], strides = [1, 1]} : vector<16x32xf32> to vector<8x16xf32>
    %40 = arith.truncf %37 : vector<8x16xf32> to vector<8x16xbf16>
    %41 = arith.truncf %38 : vector<8x16xf32> to vector<8x16xbf16>
    %cst_13 = arith.constant dense<0.000000e+00> : vector<8x8xf32>
    %42 = tpu.matmul %40, %41, %cst_13 {dimension_numbers = #tpu.dot_dimension_numbers<[1], [1], [0], [0], [0, 0, 1, 0], [], []>} : vector<8x16xbf16>, vector<8x16xbf16>, vector<8x8xf32> -> vector<8x8xf32>
    %cst_14 = arith.constant dense<0xFF800000> : vector<8xf32>
    %43 = vector.multi_reduction <maximumf>, %42, %cst_14 [1] : vector<8x8xf32> to vector<8xf32>
    %44 = vector.shape_cast %43 : vector<8xf32> to vector<8x1xf32>
    %45 = vector.broadcast %44 : vector<8x1xf32> to vector<8x8xf32>
    %46 = arith.subf %42, %45 : vector<8x8xf32>
    %47 = math.exp %46 : vector<8x8xf32>
    %cst_15 = arith.constant dense<0.000000e+00> : vector<8xf32>
    %48 = vector.multi_reduction <add>, %47, %cst_15 [1] : vector<8x8xf32> to vector<8xf32>
    %49 = vector.shape_cast %48 : vector<8xf32> to vector<8x1xf32>
    %50 = tpu.reciprocal %49 {approx = true} : vector<8x1xf32> -> vector<8x1xf32>
    %51 = vector.broadcast %50 : vector<8x1xf32> to vector<8x8xf32>
    %52 = arith.mulf %47, %51 : vector<8x8xf32>
    %53 = arith.truncf %52 : vector<8x8xf32> to vector<8x8xbf16>
    %54 = arith.truncf %39 : vector<8x16xf32> to vector<8x16xbf16>
    %cst_16 = arith.constant dense<0.000000e+00> : vector<8x16xf32>
    %55 = tpu.matmul %53, %54, %cst_16 {dimension_numbers = #tpu.dot_dimension_numbers<[1], [0], [0], [1], [0, 0, 1, 1], [], []>} : vector<8x8xbf16>, vector<8x16xbf16>, vector<8x16xf32> -> vector<8x16xf32>
    %56 = tpu.concatenate %36, %55 in 1 : vector<8x16xf32>, vector<8x16xf32> -> vector<8x32xf32>
    %57 = vector.extract_strided_slice %15 {offsets = [8, 0], sizes = [8, 16], strides = [1, 1]} : vector<16x32xf32> to vector<8x16xf32>
    %58 = vector.extract_strided_slice %16 {offsets = [8, 0], sizes = [8, 16], strides = [1, 1]} : vector<16x32xf32> to vector<8x16xf32>
    %59 = vector.extract_strided_slice %17 {offsets = [8, 0], sizes = [8, 16], strides = [1, 1]} : vector<16x32xf32> to vector<8x16xf32>
    %60 = arith.truncf %57 : vector<8x16xf32> to vector<8x16xbf16>
    %61 = arith.truncf %58 : vector<8x16xf32> to vector<8x16xbf16>
    %cst_17 = arith.constant dense<0.000000e+00> : vector<8x8xf32>
    %62 = tpu.matmul %60, %61, %cst_17 {dimension_numbers = #tpu.dot_dimension_numbers<[1], [1], [0], [0], [0, 0, 1, 0], [], []>} : vector<8x16xbf16>, vector<8x16xbf16>, vector<8x8xf32> -> vector<8x8xf32>
    %cst_18 = arith.constant dense<0xFF800000> : vector<8xf32>
    %63 = vector.multi_reduction <maximumf>, %62, %cst_18 [1] : vector<8x8xf32> to vector<8xf32>
    %64 = vector.shape_cast %63 : vector<8xf32> to vector<8x1xf32>
    %65 = vector.broadcast %64 : vector<8x1xf32> to vector<8x8xf32>
    %66 = arith.subf %62, %65 : vector<8x8xf32>
    %67 = math.exp %66 : vector<8x8xf32>
    %cst_19 = arith.constant dense<0.000000e+00> : vector<8xf32>
    %68 = vector.multi_reduction <add>, %67, %cst_19 [1] : vector<8x8xf32> to vector<8xf32>
    %69 = vector.shape_cast %68 : vector<8xf32> to vector<8x1xf32>
    %70 = tpu.reciprocal %69 {approx = true} : vector<8x1xf32> -> vector<8x1xf32>
    %71 = vector.broadcast %70 : vector<8x1xf32> to vector<8x8xf32>
    %72 = arith.mulf %67, %71 : vector<8x8xf32>
    %73 = arith.truncf %72 : vector<8x8xf32> to vector<8x8xbf16>
    %74 = arith.truncf %59 : vector<8x16xf32> to vector<8x16xbf16>
    %cst_20 = arith.constant dense<0.000000e+00> : vector<8x16xf32>
    %75 = tpu.matmul %73, %74, %cst_20 {dimension_numbers = #tpu.dot_dimension_numbers<[1], [0], [0], [1], [0, 0, 1, 1], [], []>} : vector<8x8xbf16>, vector<8x16xbf16>, vector<8x16xf32> -> vector<8x16xf32>
    %76 = vector.extract_strided_slice %15 {offsets = [8, 16], sizes = [8, 16], strides = [1, 1]} : vector<16x32xf32> to vector<8x16xf32>
    %77 = vector.extract_strided_slice %16 {offsets = [8, 16], sizes = [8, 16], strides = [1, 1]} : vector<16x32xf32> to vector<8x16xf32>
    %78 = vector.extract_strided_slice %17 {offsets = [8, 16], sizes = [8, 16], strides = [1, 1]} : vector<16x32xf32> to vector<8x16xf32>
    %79 = arith.truncf %76 : vector<8x16xf32> to vector<8x16xbf16>
    %80 = arith.truncf %77 : vector<8x16xf32> to vector<8x16xbf16>
    %cst_21 = arith.constant dense<0.000000e+00> : vector<8x8xf32>
    %81 = tpu.matmul %79, %80, %cst_21 {dimension_numbers = #tpu.dot_dimension_numbers<[1], [1], [0], [0], [0, 0, 1, 0], [], []>} : vector<8x16xbf16>, vector<8x16xbf16>, vector<8x8xf32> -> vector<8x8xf32>
    %cst_22 = arith.constant dense<0xFF800000> : vector<8xf32>
    %82 = vector.multi_reduction <maximumf>, %81, %cst_22 [1] : vector<8x8xf32> to vector<8xf32>
    %83 = vector.shape_cast %82 : vector<8xf32> to vector<8x1xf32>
    %84 = vector.broadcast %83 : vector<8x1xf32> to vector<8x8xf32>
    %85 = arith.subf %81, %84 : vector<8x8xf32>
    %86 = math.exp %85 : vector<8x8xf32>
    %cst_23 = arith.constant dense<0.000000e+00> : vector<8xf32>
    %87 = vector.multi_reduction <add>, %86, %cst_23 [1] : vector<8x8xf32> to vector<8xf32>
    %88 = vector.shape_cast %87 : vector<8xf32> to vector<8x1xf32>
    %89 = tpu.reciprocal %88 {approx = true} : vector<8x1xf32> -> vector<8x1xf32>
    %90 = vector.broadcast %89 : vector<8x1xf32> to vector<8x8xf32>
    %91 = arith.mulf %86, %90 : vector<8x8xf32>
    %92 = arith.truncf %91 : vector<8x8xf32> to vector<8x8xbf16>
    %93 = arith.truncf %78 : vector<8x16xf32> to vector<8x16xbf16>
    %cst_24 = arith.constant dense<0.000000e+00> : vector<8x16xf32>
    %94 = tpu.matmul %92, %93, %cst_24 {dimension_numbers = #tpu.dot_dimension_numbers<[1], [0], [0], [1], [0, 0, 1, 1], [], []>} : vector<8x8xbf16>, vector<8x16xbf16>, vector<8x16xf32> -> vector<8x16xf32>
    %95 = tpu.concatenate %75, %94 in 1 : vector<8x16xf32>, vector<8x16xf32> -> vector<8x32xf32>
    %96 = tpu.concatenate %56, %95 in 0 : vector<8x32xf32>, vector<8x32xf32> -> vector<16x32xf32>
    %c0_25 = arith.constant 0 : index
    %c0_26 = arith.constant 0 : index
    %c0_27 = arith.constant 0 : index
    %97 = vector.load %arg5[%c0_25, %c0_26, %c0_27] : memref<1x32x32xf32, #tpu.memory_space<vmem>>, vector<1x32x32xf32>
    %98 = vector.shape_cast %97 : vector<1x32x32xf32> to vector<32x32xf32>
    %99 = arith.truncf %96 : vector<16x32xf32> to vector<16x32xbf16>
    %100 = arith.truncf %98 : vector<32x32xf32> to vector<32x32xbf16>
    %cst_28 = arith.constant dense<0.000000e+00> : vector<16x32xf32>
    %101 = tpu.matmul %99, %100, %cst_28 {dimension_numbers = #tpu.dot_dimension_numbers<[1], [0], [0], [1], [0, 0, 1, 1], [], []>} : vector<16x32xbf16>, vector<32x32xbf16>, vector<16x32xf32> -> vector<16x32xf32>
    %c0_29 = arith.constant 0 : index
    %c0_30 = arith.constant 0 : index
    %c0_31 = arith.constant 0 : index
    %102 = vector.load %arg9[%c0_29, %c0_30, %c0_31] : memref<1x8x32xf32, #tpu.memory_space<vmem>>, vector<1x1x32xf32>
    %103 = vector.shape_cast %102 : vector<1x1x32xf32> to vector<1x32xf32>
    %104 = vector.broadcast %103 : vector<1x32xf32> to vector<16x32xf32>
    %105 = arith.addf %101, %104 : vector<16x32xf32>
    %106 = arith.addf %105, %3 : vector<16x32xf32>
    %c0_32 = arith.constant 0 : index
    %c1 = arith.constant 1 : index
    %c0_33 = arith.constant 0 : index
    %107 = vector.load %arg9[%c0_32, %c1, %c0_33] : memref<1x8x32xf32, #tpu.memory_space<vmem>>, vector<1x1x32xf32>
    %108 = vector.shape_cast %107 : vector<1x1x32xf32> to vector<1x32xf32>
    %c0_34 = arith.constant 0 : index
    %c2 = arith.constant 2 : index
    %c0_35 = arith.constant 0 : index
    %109 = vector.load %arg9[%c0_34, %c2, %c0_35] : memref<1x8x32xf32, #tpu.memory_space<vmem>>, vector<1x1x32xf32>
    %110 = vector.shape_cast %109 : vector<1x1x32xf32> to vector<1x32xf32>
    %cst_36 = arith.constant dense<0.000000e+00> : vector<16xf32>
    %111 = vector.multi_reduction <add>, %106, %cst_36 [1] : vector<16x32xf32> to vector<16xf32>
    %112 = vector.shape_cast %111 : vector<16xf32> to vector<16x1xf32>
    %cst_37 = arith.constant 3.200000e+01 : f32
    %113 = vector.broadcast %cst_37 : f32 to vector<16x1xf32>
    %114 = arith.divf %112, %113 : vector<16x1xf32>
    %115 = vector.broadcast %114 : vector<16x1xf32> to vector<16x32xf32>
    %116 = arith.subf %106, %115 : vector<16x32xf32>
    %117 = arith.mulf %116, %116 : vector<16x32xf32>
    %cst_38 = arith.constant dense<0.000000e+00> : vector<16xf32>
    %118 = vector.multi_reduction <add>, %117, %cst_38 [1] : vector<16x32xf32> to vector<16xf32>
    %119 = vector.shape_cast %118 : vector<16xf32> to vector<16x1xf32>
    %cst_39 = arith.constant 3.200000e+01 : f32
    %120 = vector.broadcast %cst_39 : f32 to vector<16x1xf32>
    %121 = arith.divf %119, %120 : vector<16x1xf32>
    %122 = vector.broadcast %114 : vector<16x1xf32> to vector<16x32xf32>
    %123 = arith.subf %106, %122 : vector<16x32xf32>
    %cst_40 = arith.constant 9.99999996E-13 : f32
    %124 = vector.broadcast %cst_40 : f32 to vector<16x1xf32>
    %125 = arith.addf %121, %124 : vector<16x1xf32>
    %126 = math.rsqrt %125 : vector<16x1xf32>
    %127 = vector.broadcast %126 : vector<16x1xf32> to vector<16x32xf32>
    %128 = arith.mulf %123, %127 : vector<16x32xf32>
    %129 = vector.broadcast %108 : vector<1x32xf32> to vector<16x32xf32>
    %130 = arith.mulf %128, %129 : vector<16x32xf32>
    %131 = vector.broadcast %110 : vector<1x32xf32> to vector<16x32xf32>
    %132 = arith.addf %130, %131 : vector<16x32xf32>
    %c0_41 = arith.constant 0 : index
    %c0_42 = arith.constant 0 : index
    %c0_43 = arith.constant 0 : index
    %133 = vector.load %arg6[%c0_41, %c0_42, %c0_43] : memref<1x32x64xf32, #tpu.memory_space<vmem>>, vector<1x32x64xf32>
    %134 = vector.shape_cast %133 : vector<1x32x64xf32> to vector<32x64xf32>
    %135 = arith.truncf %132 : vector<16x32xf32> to vector<16x32xbf16>
    %136 = arith.truncf %134 : vector<32x64xf32> to vector<32x64xbf16>
    %cst_44 = arith.constant dense<0.000000e+00> : vector<16x64xf32>
    %137 = tpu.matmul %135, %136, %cst_44 {dimension_numbers = #tpu.dot_dimension_numbers<[1], [0], [0], [1], [0, 0, 1, 1], [], []>} : vector<16x32xbf16>, vector<32x64xbf16>, vector<16x64xf32> -> vector<16x64xf32>
    %c0_45 = arith.constant 0 : index
    %c0_46 = arith.constant 0 : index
    %c0_47 = arith.constant 0 : index
    %138 = vector.load %arg7[%c0_45, %c0_46, %c0_47] : memref<1x1x64xf32, #tpu.memory_space<vmem>>, vector<1x1x64xf32>
    %139 = vector.shape_cast %138 : vector<1x1x64xf32> to vector<1x64xf32>
    %140 = vector.broadcast %139 : vector<1x64xf32> to vector<16x64xf32>
    %141 = arith.addf %137, %140 : vector<16x64xf32>
    %cst_48 = arith.constant 5.000000e-01 : f32
    %142 = vector.broadcast %cst_48 : f32 to vector<16x64xf32>
    %143 = arith.mulf %142, %141 : vector<16x64xf32>
    %cst_49 = arith.constant 0.707106769 : f32
    %144 = vector.broadcast %cst_49 : f32 to vector<16x64xf32>
    %145 = arith.mulf %141, %144 : vector<16x64xf32>
    %146 = math.absf %145 : vector<16x64xf32>
    %cst_50 = arith.constant 0.327591091 : f32
    %147 = vector.broadcast %cst_50 : f32 to vector<16x64xf32>
    %148 = arith.mulf %147, %146 : vector<16x64xf32>
    %cst_51 = arith.constant 1.000000e+00 : f32
    %149 = vector.broadcast %cst_51 : f32 to vector<16x64xf32>
    %150 = arith.addf %149, %148 : vector<16x64xf32>
    %cst_52 = arith.constant 1.000000e+00 : f32
    %151 = vector.broadcast %cst_52 : f32 to vector<16x64xf32>
    %152 = arith.divf %151, %150 : vector<16x64xf32>
    %cst_53 = arith.constant 1.06140542 : f32
    %153 = vector.broadcast %cst_53 : f32 to vector<16x64xf32>
    %154 = arith.mulf %153, %152 : vector<16x64xf32>
    %cst_54 = arith.constant -1.45315206 : f32
    %155 = vector.broadcast %cst_54 : f32 to vector<16x64xf32>
    %156 = arith.addf %154, %155 : vector<16x64xf32>
    %157 = arith.mulf %156, %152 : vector<16x64xf32>
    %cst_55 = arith.constant 1.42141378 : f32
    %158 = vector.broadcast %cst_55 : f32 to vector<16x64xf32>
    %159 = arith.addf %157, %158 : vector<16x64xf32>
    %160 = arith.mulf %159, %152 : vector<16x64xf32>
    %cst_56 = arith.constant -0.284496725 : f32
    %161 = vector.broadcast %cst_56 : f32 to vector<16x64xf32>
    %162 = arith.addf %160, %161 : vector<16x64xf32>
    %163 = arith.mulf %162, %152 : vector<16x64xf32>
    %cst_57 = arith.constant 0.254829586 : f32
    %164 = vector.broadcast %cst_57 : f32 to vector<16x64xf32>
    %165 = arith.addf %163, %164 : vector<16x64xf32>
    %166 = arith.mulf %165, %152 : vector<16x64xf32>
    %cst_58 = arith.constant 0.000000e+00 : f32
    %167 = vector.broadcast %cst_58 : f32 to vector<16x64xf32>
    %168 = arith.subf %167, %146 : vector<16x64xf32>
    %169 = arith.mulf %168, %146 : vector<16x64xf32>
    %170 = math.exp %169 : vector<16x64xf32>
    %171 = arith.mulf %166, %170 : vector<16x64xf32>
    %cst_59 = arith.constant 1.000000e+00 : f32
    %172 = vector.broadcast %cst_59 : f32 to vector<16x64xf32>
    %173 = arith.subf %172, %171 : vector<16x64xf32>
    %cst_60 = arith.constant 0.000000e+00 : f32
    %174 = vector.broadcast %cst_60 : f32 to vector<16x64xf32>
    %175 = arith.cmpf oge, %145, %174 : vector<16x64xf32>
    %cst_61 = arith.constant 0.000000e+00 : f32
    %176 = vector.broadcast %cst_61 : f32 to vector<16x64xf32>
    %177 = arith.subf %176, %173 : vector<16x64xf32>
    %178 = arith.select %175, %173, %177 : vector<16x64xi1>, vector<16x64xf32>
    %cst_62 = arith.constant 1.000000e+00 : f32
    %179 = vector.broadcast %cst_62 : f32 to vector<16x64xf32>
    %180 = arith.addf %179, %178 : vector<16x64xf32>
    %181 = arith.mulf %143, %180 : vector<16x64xf32>
    %c0_63 = arith.constant 0 : index
    %c0_64 = arith.constant 0 : index
    %c0_65 = arith.constant 0 : index
    %182 = vector.load %arg8[%c0_63, %c0_64, %c0_65] : memref<1x64x32xf32, #tpu.memory_space<vmem>>, vector<1x64x32xf32>
    %183 = vector.shape_cast %182 : vector<1x64x32xf32> to vector<64x32xf32>
    %184 = arith.truncf %181 : vector<16x64xf32> to vector<16x64xbf16>
    %185 = arith.truncf %183 : vector<64x32xf32> to vector<64x32xbf16>
    %cst_66 = arith.constant dense<0.000000e+00> : vector<16x32xf32>
    %186 = tpu.matmul %184, %185, %cst_66 {dimension_numbers = #tpu.dot_dimension_numbers<[1], [0], [0], [1], [0, 0, 1, 1], [], []>} : vector<16x64xbf16>, vector<64x32xbf16>, vector<16x32xf32> -> vector<16x32xf32>
    %c0_67 = arith.constant 0 : index
    %c3 = arith.constant 3 : index
    %c0_68 = arith.constant 0 : index
    %187 = vector.load %arg9[%c0_67, %c3, %c0_68] : memref<1x8x32xf32, #tpu.memory_space<vmem>>, vector<1x1x32xf32>
    %188 = vector.shape_cast %187 : vector<1x1x32xf32> to vector<1x32xf32>
    %189 = vector.broadcast %188 : vector<1x32xf32> to vector<16x32xf32>
    %190 = arith.addf %186, %189 : vector<16x32xf32>
    %191 = arith.addf %190, %132 : vector<16x32xf32>
    %c0_69 = arith.constant 0 : index
    %c4 = arith.constant 4 : index
    %c0_70 = arith.constant 0 : index
    %192 = vector.load %arg9[%c0_69, %c4, %c0_70] : memref<1x8x32xf32, #tpu.memory_space<vmem>>, vector<1x1x32xf32>
    %193 = vector.shape_cast %192 : vector<1x1x32xf32> to vector<1x32xf32>
    %c0_71 = arith.constant 0 : index
    %c5 = arith.constant 5 : index
    %c0_72 = arith.constant 0 : index
    %194 = vector.load %arg9[%c0_71, %c5, %c0_72] : memref<1x8x32xf32, #tpu.memory_space<vmem>>, vector<1x1x32xf32>
    %195 = vector.shape_cast %194 : vector<1x1x32xf32> to vector<1x32xf32>
    %cst_73 = arith.constant dense<0.000000e+00> : vector<16xf32>
    %196 = vector.multi_reduction <add>, %191, %cst_73 [1] : vector<16x32xf32> to vector<16xf32>
    %197 = vector.shape_cast %196 : vector<16xf32> to vector<16x1xf32>
    %cst_74 = arith.constant 3.200000e+01 : f32
    %198 = vector.broadcast %cst_74 : f32 to vector<16x1xf32>
    %199 = arith.divf %197, %198 : vector<16x1xf32>
    %200 = vector.broadcast %199 : vector<16x1xf32> to vector<16x32xf32>
    %201 = arith.subf %191, %200 : vector<16x32xf32>
    %202 = arith.mulf %201, %201 : vector<16x32xf32>
    %cst_75 = arith.constant dense<0.000000e+00> : vector<16xf32>
    %203 = vector.multi_reduction <add>, %202, %cst_75 [1] : vector<16x32xf32> to vector<16xf32>
    %204 = vector.shape_cast %203 : vector<16xf32> to vector<16x1xf32>
    %cst_76 = arith.constant 3.200000e+01 : f32
    %205 = vector.broadcast %cst_76 : f32 to vector<16x1xf32>
    %206 = arith.divf %204, %205 : vector<16x1xf32>
    %207 = vector.broadcast %199 : vector<16x1xf32> to vector<16x32xf32>
    %208 = arith.subf %191, %207 : vector<16x32xf32>
    %cst_77 = arith.constant 9.99999996E-13 : f32
    %209 = vector.broadcast %cst_77 : f32 to vector<16x1xf32>
    %210 = arith.addf %206, %209 : vector<16x1xf32>
    %211 = math.rsqrt %210 : vector<16x1xf32>
    %212 = vector.broadcast %211 : vector<16x1xf32> to vector<16x32xf32>
    %213 = arith.mulf %208, %212 : vector<16x32xf32>
    %214 = vector.broadcast %193 : vector<1x32xf32> to vector<16x32xf32>
    %215 = arith.mulf %213, %214 : vector<16x32xf32>
    %216 = vector.broadcast %195 : vector<1x32xf32> to vector<16x32xf32>
    %217 = arith.addf %215, %216 : vector<16x32xf32>
    %c0_78 = arith.constant 0 : index
    %c0_79 = arith.constant 0 : index
    %218 = vector.load %arg14[%c0_78, %c0_79] : memref<16x32xf32, #tpu.memory_space<vmem>>, vector<16x32xf32>
    tpu.vector_store %arg14[%c0_78, %c0_79], %217 {strides = array<i32>} : memref<16x32xf32, #tpu.memory_space<vmem>>, vector<16x32xf32>,
    %c1_i32 = arith.constant 1 : i32
    %219 = arith.cmpi eq, %arg0, %c1_i32 : i32
    %220 = arith.extui %219 : i1 to i32
    %c0_i32_80 = arith.constant 0 : i32
    %221 = arith.cmpi ne, %220, %c0_i32_80 : i32
    scf.if %221 {
      %c0_81 = arith.constant 0 : index
      %c0_82 = arith.constant 0 : index
      %222 = vector.load %arg14[%c0_81, %c0_82] : memref<16x32xf32, #tpu.memory_space<vmem>>, vector<16x32xf32>
      %223 = vector.extract_strided_slice %222 {offsets = [0, 0], sizes = [1, 32], strides = [1, 1]} : vector<16x32xf32> to vector<1x32xf32>
      %224 = vector.extract_strided_slice %222 {offsets = [8, 0], sizes = [1, 32], strides = [1, 1]} : vector<16x32xf32> to vector<1x32xf32>
      %225 = tpu.concatenate %223, %224 in 0 : vector<1x32xf32>, vector<1x32xf32> -> vector<2x32xf32>
      %c0_83 = arith.constant 0 : index
      %c0_84 = arith.constant 0 : index
      %226 = vector.load %arg10[%c0_83, %c0_84] : memref<32x32xf32, #tpu.memory_space<vmem>>, vector<32x32xf32>
      %227 = arith.truncf %225 : vector<2x32xf32> to vector<2x32xbf16>
      %228 = arith.truncf %226 : vector<32x32xf32> to vector<32x32xbf16>
      %cst_85 = arith.constant dense<0.000000e+00> : vector<2x32xf32>
      %229 = tpu.matmul %227, %228, %cst_85 {dimension_numbers = #tpu.dot_dimension_numbers<[1], [0], [0], [1], [0, 0, 1, 1], [], []>} : vector<2x32xbf16>, vector<32x32xbf16>, vector<2x32xf32> -> vector<2x32xf32>
      %c2_86 = arith.constant 2 : index
      %c0_87 = arith.constant 0 : index
      %230 = vector.load %arg2[%c2_86, %c0_87] : memref<8x32xf32, #tpu.memory_space<vmem>>, vector<1x32xf32>
      %231 = vector.broadcast %230 : vector<1x32xf32> to vector<2x32xf32>
      %232 = arith.addf %229, %231 : vector<2x32xf32>
      %233 = math.tanh %232 : vector<2x32xf32>
      %c0_88 = arith.constant 0 : index
      %c0_89 = arith.constant 0 : index
      %234 = vector.load %arg11[%c0_88, %c0_89] : memref<32x2xf32, #tpu.memory_space<vmem>>, vector<32x2xf32>
      %235 = arith.truncf %233 : vector<2x32xf32> to vector<2x32xbf16>
      %236 = arith.truncf %234 : vector<32x2xf32> to vector<32x2xbf16>
      %cst_90 = arith.constant dense<0.000000e+00> : vector<2x2xf32>
      %237 = tpu.matmul %235, %236, %cst_90 {dimension_numbers = #tpu.dot_dimension_numbers<[1], [0], [0], [1], [0, 0, 1, 1], [], []>} : vector<2x32xbf16>, vector<32x2xbf16>, vector<2x2xf32> -> vector<2x2xf32>
      %c0_91 = arith.constant 0 : index
      %c0_92 = arith.constant 0 : index
      %238 = vector.load %arg12[%c0_91, %c0_92] : memref<1x2xf32, #tpu.memory_space<vmem>>, vector<1x2xf32>
      %239 = vector.broadcast %238 : vector<1x2xf32> to vector<2x2xf32>
      %240 = arith.addf %237, %239 : vector<2x2xf32>
      %c0_93 = arith.constant 0 : index
      %c0_94 = arith.constant 0 : index
      %241 = vector.load %arg13[%c0_93, %c0_94] : memref<2x2xf32, #tpu.memory_space<vmem>>, vector<2x2xf32>
      tpu.vector_store %arg13[%c0_93, %c0_94], %240 {strides = array<i32>} : memref<2x2xf32, #tpu.memory_space<vmem>>, vector<2x2xf32>,
    } else {
    }
    return
  }
  func.func @transform_0(%arg0: i32) -> (i32, i32) {
    %c0_i32 = arith.constant 0 : i32
    %c0_i32_0 = arith.constant 0 : i32
    %c0_i32_1 = arith.constant 0 : i32
    return %c0_i32, %c0_i32_0 : i32, i32
  }
  func.func @transform_1(%arg0: i32) -> (i32, i32) {
    %c0_i32 = arith.constant 0 : i32
    %c0_i32_0 = arith.constant 0 : i32
    %c0_i32_1 = arith.constant 0 : i32
    return %c0_i32, %c0_i32_0 : i32, i32
  }
  func.func @transform_2(%arg0: i32) -> (i32, i32, i32) {
    %c0_i32 = arith.constant 0 : i32
    %c0_i32_0 = arith.constant 0 : i32
    %c0_i32_1 = arith.constant 0 : i32
    return %arg0, %c0_i32, %c0_i32_0 : i32, i32, i32
  }
  func.func @transform_3(%arg0: i32) -> (i32, i32, i32) {
    %c0_i32 = arith.constant 0 : i32
    %c0_i32_0 = arith.constant 0 : i32
    %c0_i32_1 = arith.constant 0 : i32
    return %arg0, %c0_i32, %c0_i32_0 : i32, i32, i32
  }
  func.func @transform_4(%arg0: i32) -> (i32, i32, i32) {
    %c0_i32 = arith.constant 0 : i32
    %c0_i32_0 = arith.constant 0 : i32
    %c0_i32_1 = arith.constant 0 : i32
    return %arg0, %c0_i32, %c0_i32_0 : i32, i32, i32
  }
  func.func @transform_5(%arg0: i32) -> (i32, i32, i32) {
    %c0_i32 = arith.constant 0 : i32
    %c0_i32_0 = arith.constant 0 : i32
    %c0_i32_1 = arith.constant 0 : i32
    return %arg0, %c0_i32, %c0_i32_0 : i32, i32, i32
  }
  func.func @transform_6(%arg0: i32) -> (i32, i32, i32) {
    %c0_i32 = arith.constant 0 : i32
    %c0_i32_0 = arith.constant 0 : i32
    %c0_i32_1 = arith.constant 0 : i32
    return %arg0, %c0_i32, %c0_i32_0 : i32, i32, i32
  }
  func.func @transform_7(%arg0: i32) -> (i32, i32, i32) {
    %c0_i32 = arith.constant 0 : i32
    %c0_i32_0 = arith.constant 0 : i32
    %c0_i32_1 = arith.constant 0 : i32
    return %arg0, %c0_i32, %c0_i32_0 : i32, i32, i32
  }
  func.func @transform_8(%arg0: i32) -> (i32, i32, i32) {
    %c0_i32 = arith.constant 0 : i32
    %c0_i32_0 = arith.constant 0 : i32
    %c0_i32_1 = arith.constant 0 : i32
    return %arg0, %c0_i32, %c0_i32_0 : i32, i32, i32
  }
  func.func @transform_9(%arg0: i32) -> (i32, i32) {
    %c0_i32 = arith.constant 0 : i32
    %c0_i32_0 = arith.constant 0 : i32
    %c0_i32_1 = arith.constant 0 : i32
    return %c0_i32, %c0_i32_0 : i32, i32
  }
  func.func @transform_10(%arg0: i32) -> (i32, i32) {
    %c0_i32 = arith.constant 0 : i32
    %c0_i32_0 = arith.constant 0 : i32
    %c0_i32_1 = arith.constant 0 : i32
    return %c0_i32, %c0_i32_0 : i32, i32
  }
  func.func @transform_11(%arg0: i32) -> (i32, i32) {
    %c0_i32 = arith.constant 0 : i32
    %c0_i32_0 = arith.constant 0 : i32
    %c0_i32_1 = arith.constant 0 : i32
    return %c0_i32, %c0_i32_0 : i32, i32
  }
  func.func @transform_12(%arg0: i32) -> (i32, i32) {
    %c0_i32 = arith.constant 0 : i32
    %c0_i32_0 = arith.constant 0 : i32
    %c0_i32_1 = arith.constant 0 : i32
    return %c0_i32, %c0_i32_0 : i32, i32
  }
}

</mosaic_0001>

<llo_original>
// kernel: sentence_classification_forward.1
$region0: #{sentence_classification_forward.1}
  #allocation0 [shape = 'u32[]', space=smem, size = 0x4, offset = 0x4, fixed_abs, tag = 'smem constant byte address 0x4 - core index']
  #allocation1 [shape = 'u32[144,128]{1,0:T(1,128)}', space=vmem, size = 0x12000, scoped, tag = 'internal scratch']
  #allocation2 [shape = 'f32[16,32]{1,0:T(8,128)}', space=vmem, size = 0x2000, scoped, tag = 'scratch operand']
  %s0 = inlined_call_operand.vmem [shape: f32[16,32], index: 0, kind: input, shape index: {}]
  %s1 = inlined_call_operand.vmem [shape: f32[8,32], index: 1, kind: input, shape index: {}]
  %s2 = inlined_call_operand.vmem [shape: f32[2,32,96], index: 2, kind: input, shape index: {}]
  %s3 = inlined_call_operand.vmem [shape: f32[2,1,96], index: 3, kind: input, shape index: {}]
  %s4 = inlined_call_operand.vmem [shape: f32[2,32,32], index: 4, kind: input, shape index: {}]
  %s5 = inlined_call_operand.vmem [shape: f32[2,32,64], index: 5, kind: input, shape index: {}]
  %s6 = inlined_call_operand.vmem [shape: f32[2,1,64], index: 6, kind: input, shape index: {}]
  %s7 = inlined_call_operand.vmem [shape: f32[2,64,32], index: 7, kind: input, shape index: {}]
  %s8 = inlined_call_operand.vmem [shape: f32[2,8,32], index: 8, kind: input, shape index: {}]
  %s9 = inlined_call_operand.vmem [shape: f32[32,32], index: 9, kind: input, shape index: {}]
  %s10 = inlined_call_operand.vmem [shape: f32[32,2], index: 10, kind: input, shape index: {}]
  %s11 = inlined_call_operand.vmem [shape: f32[1,2], index: 11, kind: input, shape index: {}]
  %s12 = inlined_call_operand.hbm [shape: f32[2,2], index: 12, kind: output, shape index: {}]
  %s13 = sld [smem:[#allocation0]]
  $region89: #{sentence_classification_forward.1} parent=0
    _
  %s15 = ssub.s32 1, %s13
  %s16 = scalar_select 0, %s15, %s13
  $region1: #{sentence_classification_forward.1} parent=0
    #allocation3 [shape = 'u8[1024]{0}', space=vmem, size = 0x400, scoped, tag = 'output window, operand 0, single buffered']
    #allocation4 [shape = 's32[2]{0}', space=sflag, size = 0x8, scoped, tag = 'scoped memory for sentence_classification_forward.1']
    %17 = vsyncpa [#allocation4], 0
    loop: start=0, step=1, limit=4
    $region2: #{sentence_classification_forward.1} parent=1 // loop_pre_header
      _
    $region3: #{sentence_classification_forward.1} parent=1 // loop_header
      %s19 = sphi 0, %s23
      %p20 = scmp.ge.s32.totalorder %s19, 4
      %s27 = sphi 0, %s27
      %s29 = sphi 0, %s27
      %s30 = sphi 0, %s29
      %s44 = sphi 0, %s30
      %s48 = sphi 0, %s48
      %s50 = sphi 0, %s48
      %s51 = sphi 0, %s50
      %s65 = sphi 0, %s51
      %s71 = sphi 0, %s73
      %s74 = sphi 0, %s71
      %s75 = sphi 0, %s74
      %s91 = sphi 0, %s75
      %s97 = sphi 0, %s99
      %s100 = sphi 0, %s97
      %s101 = sphi 0, %s100
      %s117 = sphi 0, %s101
      %s123 = sphi 0, %s125
      %s126 = sphi 0, %s123
      %s127 = sphi 0, %s126
      %s143 = sphi 0, %s127
      %s149 = sphi 0, %s151
      %s152 = sphi 0, %s149
      %s153 = sphi 0, %s152
      %s169 = sphi 0, %s153
      %s175 = sphi 0, %s177
      %s178 = sphi 0, %s175
      %s179 = sphi 0, %s178
      %s195 = sphi 0, %s179
      %s201 = sphi 0, %s203
      %s204 = sphi 0, %s201
      %s205 = sphi 0, %s204
      %s221 = sphi 0, %s205
      %s227 = sphi 0, %s229
      %s230 = sphi 0, %s227
      %s231 = sphi 0, %s230
      %s247 = sphi 0, %s231
      %s251 = sphi 0, %s251
      %s253 = sphi 0, %s251
      %s254 = sphi 0, %s253
      %s268 = sphi 0, %s254
      %s272 = sphi 0, %s272
      %s274 = sphi 0, %s272
      %s275 = sphi 0, %s274
      %s289 = sphi 0, %s275
      %s293 = sphi 0, %s293
      %s295 = sphi 0, %s293
      %s296 = sphi 0, %s295
      %s310 = sphi 0, %s296
      %s314 = sphi 0, %s314
      %s316 = sphi 0, %s314
      %s317 = sphi 0, %s316
      %s331 = sphi 0, %s317
    $region4: #{sentence_classification_forward.1} parent=1 // loop_header_branch
      %22 = sbr.rel (%p20) target = $region8
    $region5: #{sentence_classification_forward.1} parent=1 // loop_body
      %s24 = ssub.s32 %s19, 1
      %s25 = ssub.s32 %s19, 2
      %s26 = sadd.s32 %s19, 1
      %s28 = sadd.s32 %s27, 1
      %p31 = scmp.eq.s32.totalorder %s19, 1
      %p32 = scmp.ne.s32.totalorder %s27, %s29
      %p33 = scmp.eq.s32.totalorder %s19, 0
      %p34 = por %p32, %p33
      %p35 = scmp.ne.s32.totalorder %s27, %s29
      %p36 = scmp.eq.s32.totalorder %s24, 1
      %p37 = por %p35, %p36
      %p38 = scmp.ne.s32.totalorder %s29, %s30
      %p39 = scmp.eq.s32.totalorder %s24, 0
      %p40 = por %p38, %p39
      %p41 = scmp.ne.s32.totalorder %s29, %s30
      %p42 = scmp.eq.s32.totalorder %s25, 1
      %p43 = por %p41, %p42
      %p45 = scmp.ne.s32.totalorder %s30, %s44
      %p46 = scmp.eq.s32.totalorder %s25, 0
      %p47 = por %p45, %p46
      %s49 = sadd.s32 %s48, 1
      %p52 = scmp.eq.s32.totalorder %s19, 1
      %p53 = scmp.ne.s32.totalorder %s48, %s50
      %p54 = scmp.eq.s32.totalorder %s19, 0
      %p55 = por %p53, %p54
      %p56 = scmp.ne.s32.totalorder %s48, %s50
      %p57 = scmp.eq.s32.totalorder %s24, 1
      %p58 = por %p56, %p57
      %p59 = scmp.ne.s32.totalorder %s50, %s51
      %p60 = scmp.eq.s32.totalorder %s24, 0
      %p61 = por %p59, %p60
      %p62 = scmp.ne.s32.totalorder %s50, %s51
      %p63 = scmp.eq.s32.totalorder %s25, 1
      %p64 = por %p62, %p63
      %p66 = scmp.ne.s32.totalorder %s51, %s65
      %p67 = scmp.eq.s32.totalorder %s25, 0
      %p68 = por %p66, %p67
      %s69 = ssub.s32 %s19, %s26
      %p70 = scmp.eq.s32.totalorder %s69, 0
      %s72 = sadd.s32 %s71, 1
      %s73 = scalar_select %p70, %s71, %s72
      %p76 = pneg %p70
      %p77 = scmp.eq.s32.totalorder %s19, 1
      %p78 = por %p76, %p77
      %p79 = scmp.ne.s32.totalorder %s71, %s74
      %p80 = scmp.eq.s32.totalorder %s19, 0
      %p81 = por %p79, %p80
      %p82 = scmp.ne.s32.totalorder %s71, %s74
      %p83 = scmp.eq.s32.totalorder %s24, 1
      %p84 = por %p82, %p83
      %p85 = scmp.ne.s32.totalorder %s74, %s75
      %p86 = scmp.eq.s32.totalorder %s24, 0
      %p87 = por %p85, %p86
      %p88 = scmp.ne.s32.totalorder %s74, %s75
      %p89 = scmp.eq.s32.totalorder %s25, 1
      %p90 = por %p88, %p89
      %p92 = scmp.ne.s32.totalorder %s75, %s91
      %p93 = scmp.eq.s32.totalorder %s25, 0
      %p94 = por %p92, %p93
      %s95 = ssub.s32 %s19, %s26
      %p96 = scmp.eq.s32.totalorder %s95, 0
      %s98 = sadd.s32 %s97, 1
      %s99 = scalar_select %p96, %s97, %s98
      %p102 = pneg %p96
      %p103 = scmp.eq.s32.totalorder %s19, 1
      %p104 = por %p102, %p103
      %p105 = scmp.ne.s32.totalorder %s97, %s100
      %p106 = scmp.eq.s32.totalorder %s19, 0
      %p107 = por %p105, %p106
      %p108 = scmp.ne.s32.totalorder %s97, %s100
      %p109 = scmp.eq.s32.totalorder %s24, 1
      %p110 = por %p108, %p109
      %p111 = scmp.ne.s32.totalorder %s100, %s101
      %p112 = scmp.eq.s32.totalorder %s24, 0
      %p113 = por %p111, %p112
      %p114 = scmp.ne.s32.totalorder %s100, %s101
      %p115 = scmp.eq.s32.totalorder %s25, 1
      %p116 = por %p114, %p115
      %p118 = scmp.ne.s32.totalorder %s101, %s117
      %p119 = scmp.eq.s32.totalorder %s25, 0
      %p120 = por %p118, %p119
      %s121 = ssub.s32 %s19, %s26
      %p122 = scmp.eq.s32.totalorder %s121, 0
      %s124 = sadd.s32 %s123, 1
      %s125 = scalar_select %p122, %s123, %s124
      %p128 = pneg %p122
      %p129 = scmp.eq.s32.totalorder %s19, 1
      %p130 = por %p128, %p129
      %p131 = scmp.ne.s32.totalorder %s123, %s126
      %p132 = scmp.eq.s32.totalorder %s19, 0
      %p133 = por %p131, %p132
      %p134 = scmp.ne.s32.totalorder %s123, %s126
      %p135 = scmp.eq.s32.totalorder %s24, 1
      %p136 = por %p134, %p135
      %p137 = scmp.ne.s32.totalorder %s126, %s127
      %p138 = scmp.eq.s32.totalorder %s24, 0
      %p139 = por %p137, %p138
      %p140 = scmp.ne.s32.totalorder %s126, %s127
      %p141 = scmp.eq.s32.totalorder %s25, 1
      %p142 = por %p140, %p141
      %p144 = scmp.ne.s32.totalorder %s127, %s143
      %p145 = scmp.eq.s32.totalorder %s25, 0
      %p146 = por %p144, %p145
      %s147 = ssub.s32 %s19, %s26
      %p148 = scmp.eq.s32.totalorder %s147, 0
      %s150 = sadd.s32 %s149, 1
      %s151 = scalar_select %p148, %s149, %s150
      %p154 = pneg %p148
      %p155 = scmp.eq.s32.totalorder %s19, 1
      %p156 = por %p154, %p155
      %p157 = scmp.ne.s32.totalorder %s149, %s152
      %p158 = scmp.eq.s32.totalorder %s19, 0
      %p159 = por %p157, %p158
      %p160 = scmp.ne.s32.totalorder %s149, %s152
      %p161 = scmp.eq.s32.totalorder %s24, 1
      %p162 = por %p160, %p161
      %p163 = scmp.ne.s32.totalorder %s152, %s153
      %p164 = scmp.eq.s32.totalorder %s24, 0
      %p165 = por %p163, %p164
      %p166 = scmp.ne.s32.totalorder %s152, %s153
      %p167 = scmp.eq.s32.totalorder %s25, 1
      %p168 = por %p166, %p167
      %p170 = scmp.ne.s32.totalorder %s153, %s169
      %p171 = scmp.eq.s32.totalorder %s25, 0
      %p172 = por %p170, %p171
      %s173 = ssub.s32 %s19, %s26
      %p174 = scmp.eq.s32.totalorder %s173, 0
      %s176 = sadd.s32 %s175, 1
      %s177 = scalar_select %p174, %s175, %s176
      %p180 = pneg %p174
      %p181 = scmp.eq.s32.totalorder %s19, 1
      %p182 = por %p180, %p181
      %p183 = scmp.ne.s32.totalorder %s175, %s178
      %p184 = scmp.eq.s32.totalorder %s19, 0
      %p185 = por %p183, %p184
      %p186 = scmp.ne.s32.totalorder %s175, %s178
      %p187 = scmp.eq.s32.totalorder %s24, 1
      %p188 = por %p186, %p187
      %p189 = scmp.ne.s32.totalorder %s178, %s179
      %p190 = scmp.eq.s32.totalorder %s24, 0
      %p191 = por %p189, %p190
      %p192 = scmp.ne.s32.totalorder %s178, %s179
      %p193 = scmp.eq.s32.totalorder %s25, 1
      %p194 = por %p192, %p193
      %p196 = scmp.ne.s32.totalorder %s179, %s195
      %p197 = scmp.eq.s32.totalorder %s25, 0
      %p198 = por %p196, %p197
      %s199 = ssub.s32 %s19, %s26
      %p200 = scmp.eq.s32.totalorder %s199, 0
      %s202 = sadd.s32 %s201, 1
      %s203 = scalar_select %p200, %s201, %s202
      %p206 = pneg %p200
      %p207 = scmp.eq.s32.totalorder %s19, 1
      %p208 = por %p206, %p207
      %p209 = scmp.ne.s32.totalorder %s201, %s204
      %p210 = scmp.eq.s32.totalorder %s19, 0
      %p211 = por %p209, %p210
      %p212 = scmp.ne.s32.totalorder %s201, %s204
      %p213 = scmp.eq.s32.totalorder %s24, 1
      %p214 = por %p212, %p213
      %p215 = scmp.ne.s32.totalorder %s204, %s205
      %p216 = scmp.eq.s32.totalorder %s24, 0
      %p217 = por %p215, %p216
      %p218 = scmp.ne.s32.totalorder %s204, %s205
      %p219 = scmp.eq.s32.totalorder %s25, 1
      %p220 = por %p218, %p219
      %p222 = scmp.ne.s32.totalorder %s205, %s221
      %p223 = scmp.eq.s32.totalorder %s25, 0
      %p224 = por %p222, %p223
      %s225 = ssub.s32 %s19, %s26
      %p226 = scmp.eq.s32.totalorder %s225, 0
      %s228 = sadd.s32 %s227, 1
      %s229 = scalar_select %p226, %s227, %s228
      %p232 = pneg %p226
      %p233 = scmp.eq.s32.totalorder %s19, 1
      %p234 = por %p232, %p233
      %p235 = scmp.ne.s32.totalorder %s227, %s230
      %p236 = scmp.eq.s32.totalorder %s19, 0
      %p237 = por %p235, %p236
      %p238 = scmp.ne.s32.totalorder %s227, %s230
      %p239 = scmp.eq.s32.totalorder %s24, 1
      %p240 = por %p238, %p239
      %p241 = scmp.ne.s32.totalorder %s230, %s231
      %p242 = scmp.eq.s32.totalorder %s24, 0
      %p243 = por %p241, %p242
      %p244 = scmp.ne.s32.totalorder %s230, %s231
      %p245 = scmp.eq.s32.totalorder %s25, 1
      %p246 = por %p244, %p245
      %p248 = scmp.ne.s32.totalorder %s231, %s247
      %p249 = scmp.eq.s32.totalorder %s25, 0
      %p250 = por %p248, %p249
      %s252 = sadd.s32 %s251, 1
      %p255 = scmp.eq.s32.totalorder %s19, 1
      %p256 = scmp.ne.s32.totalorder %s251, %s253
      %p257 = scmp.eq.s32.totalorder %s19, 0
      %p258 = por %p256, %p257
      %p259 = scmp.ne.s32.totalorder %s251, %s253
      %p260 = scmp.eq.s32.totalorder %s24, 1
      %p261 = por %p259, %p260
      %p262 = scmp.ne.s32.totalorder %s253, %s254
      %p263 = scmp.eq.s32.totalorder %s24, 0
      %p264 = por %p262, %p263
      %p265 = scmp.ne.s32.totalorder %s253, %s254
      %p266 = scmp.eq.s32.totalorder %s25, 1
      %p267 = por %p265, %p266
      %p269 = scmp.ne.s32.totalorder %s254, %s268
      %p270 = scmp.eq.s32.totalorder %s25, 0
      %p271 = por %p269, %p270
      %s273 = sadd.s32 %s272, 1
      %p276 = scmp.eq.s32.totalorder %s19, 1
      %p277 = scmp.ne.s32.totalorder %s272, %s274
      %p278 = scmp.eq.s32.totalorder %s19, 0
      %p279 = por %p277, %p278
      %p280 = scmp.ne.s32.totalorder %s272, %s274
      %p281 = scmp.eq.s32.totalorder %s24, 1
      %p282 = por %p280, %p281
      %p283 = scmp.ne.s32.totalorder %s274, %s275
      %p284 = scmp.eq.s32.totalorder %s24, 0
      %p285 = por %p283, %p284
      %p286 = scmp.ne.s32.totalorder %s274, %s275
      %p287 = scmp.eq.s32.totalorder %s25, 1
      %p288 = por %p286, %p287
      %p290 = scmp.ne.s32.totalorder %s275, %s289
      %p291 = scmp.eq.s32.totalorder %s25, 0
      %p292 = por %p290, %p291
      %s294 = sadd.s32 %s293, 1
      %p297 = scmp.eq.s32.totalorder %s19, 1
      %p298 = scmp.ne.s32.totalorder %s293, %s295
      %p299 = scmp.eq.s32.totalorder %s19, 0
      %p300 = por %p298, %p299
      %p301 = scmp.ne.s32.totalorder %s293, %s295
      %p302 = scmp.eq.s32.totalorder %s24, 1
      %p303 = por %p301, %p302
      %p304 = scmp.ne.s32.totalorder %s295, %s296
      %p305 = scmp.eq.s32.totalorder %s24, 0
      %p306 = por %p304, %p305
      %p307 = scmp.ne.s32.totalorder %s295, %s296
      %p308 = scmp.eq.s32.totalorder %s25, 1
      %p309 = por %p307, %p308
      %p311 = scmp.ne.s32.totalorder %s296, %s310
      %p312 = scmp.eq.s32.totalorder %s25, 0
      %p313 = por %p311, %p312
      %s315 = sadd.s32 %s314, 1
      %p318 = scmp.eq.s32.totalorder %s19, 1
      %p319 = scmp.ne.s32.totalorder %s314, %s316
      %p320 = scmp.eq.s32.totalorder %s19, 0
      %p321 = por %p319, %p320
      %p322 = scmp.ne.s32.totalorder %s314, %s316
      %p323 = scmp.eq.s32.totalorder %s24, 1
      %p324 = por %p322, %p323
      %p325 = scmp.ne.s32.totalorder %s316, %s317
      %p326 = scmp.eq.s32.totalorder %s24, 0
      %p327 = por %p325, %p326
      %p328 = scmp.ne.s32.totalorder %s316, %s317
      %p329 = scmp.eq.s32.totalorder %s25, 1
      %p330 = por %p328, %p329
      %p332 = scmp.ne.s32.totalorder %s317, %s331
      %p333 = scmp.eq.s32.totalorder %s25, 0
      %p334 = por %p332, %p333
      %p335 = scmp.le.s32.totalorder 1, %s19
      %p336 = scmp.lt.s32.totalorder %s19, 3
      %p337 = pnand %p335, %p336
      %p338 = pneg %p337
      // Predicated region
      $region9: #{sentence_classification_forward.1} parent=5 // pred_check
        _
      $region10: #{sentence_classification_forward.1} parent=5 // pred_check_branch
        %340 = sbr.rel (%p337) target = $region12
      $region11: #{sentence_classification_forward.1} parent=5 // pred_region
        %s341 = ssub.s32 %s19, 1
        // Predicated region
        $region13: #{sentence_classification_forward.1} parent=11 // pred_check
          %p342 = pneg %p40
        $region14: #{sentence_classification_forward.1} parent=11 // pred_check_branch
          %344 = sbr.rel (%p342) target = $region16
        $region15: #{sentence_classification_forward.1} parent=11 // pred_region
          _
        $region16: #{sentence_classification_forward.1} parent=11 // pred_fallthru
          _
        // Predicated region
        $region17: #{sentence_classification_forward.1} parent=11 // pred_check
          %p345 = pneg %p61
        $region18: #{sentence_classification_forward.1} parent=11 // pred_check_branch
          %347 = sbr.rel (%p345) target = $region20
        $region19: #{sentence_classification_forward.1} parent=11 // pred_region
          _
        $region20: #{sentence_classification_forward.1} parent=11 // pred_fallthru
          _
        // Predicated region
        $region21: #{sentence_classification_forward.1} parent=11 // pred_check
          %p348 = pneg %p264
        $region22: #{sentence_classification_forward.1} parent=11 // pred_check_branch
          %350 = sbr.rel (%p348) target = $region24
        $region23: #{sentence_classification_forward.1} parent=11 // pred_region
          _
        $region24: #{sentence_classification_forward.1} parent=11 // pred_fallthru
          _
        // Predicated region
        $region25: #{sentence_classification_forward.1} parent=11 // pred_check
          %p351 = pneg %p285
        $region26: #{sentence_classification_forward.1} parent=11 // pred_check_branch
          %353 = sbr.rel (%p351) target = $region28
        $region27: #{sentence_classification_forward.1} parent=11 // pred_region
          _
        $region28: #{sentence_classification_forward.1} parent=11 // pred_fallthru
          _
        // Predicated region
        $region29: #{sentence_classification_forward.1} parent=11 // pred_check
          %p354 = pneg %p306
        $region30: #{sentence_classification_forward.1} parent=11 // pred_check_branch
          %356 = sbr.rel (%p354) target = $region32
        $region31: #{sentence_classification_forward.1} parent=11 // pred_region
          _
        $region32: #{sentence_classification_forward.1} parent=11 // pred_fallthru
          _
      $region12: #{sentence_classification_forward.1} parent=5 // pred_fallthru
        _
      %p357 = scmp.lt.s32.totalorder %s19, 2
      // Predicated region
      $region33: #{sentence_classification_forward.1} parent=5 // pred_check
        %p358 = pneg %p357
      $region34: #{sentence_classification_forward.1} parent=5 // pred_check_branch
        %360 = sbr.rel (%p358) target = $region36
      $region35: #{sentence_classification_forward.1} parent=5 // pred_region
        // Predicated region
        $region37: #{sentence_classification_forward.1} parent=35 // pred_check
          %p361 = pneg %p81
        $region38: #{sentence_classification_forward.1} parent=35 // pred_check_branch
          %363 = sbr.rel (%p361) target = $region40
        $region39: #{sentence_classification_forward.1} parent=35 // pred_region
          %p364 = scmp.lt.s32.totalorder %s19, 1
          %s365 = scalar_select %p364, %s19, 1
          %s366 = smul.addr %s365, 4
          %s367 = smul.addr %s366, 8
          %s368 = scalar_lea.vmem %s2, %s367
        $region40: #{sentence_classification_forward.1} parent=35 // pred_fallthru
          _
        // Predicated region
        $region41: #{sentence_classification_forward.1} parent=35 // pred_check
          %p369 = pneg %p107
        $region42: #{sentence_classification_forward.1} parent=35 // pred_check_branch
          %371 = sbr.rel (%p369) target = $region44
        $region43: #{sentence_classification_forward.1} parent=35 // pred_region
          %p372 = scmp.lt.s32.totalorder %s19, 1
          %s373 = scalar_select %p372, %s19, 1
          %s374 = scalar_lea.vmem %s3, %s373
        $region44: #{sentence_classification_forward.1} parent=35 // pred_fallthru
          _
        // Predicated region
        $region45: #{sentence_classification_forward.1} parent=35 // pred_check
          %p375 = pneg %p133
        $region46: #{sentence_classification_forward.1} parent=35 // pred_check_branch
          %377 = sbr.rel (%p375) target = $region48
        $region47: #{sentence_classification_forward.1} parent=35 // pred_region
          %p378 = scmp.lt.s32.totalorder %s19, 1
          %s379 = scalar_select %p378, %s19, 1
          %s380 = smul.addr %s379, 4
          %s381 = smul.addr %s380, 8
          %s382 = scalar_lea.vmem %s4, %s381
        $region48: #{sentence_classification_forward.1} parent=35 // pred_fallthru
          _
        // Predicated region
        $region49: #{sentence_classification_forward.1} parent=35 // pred_check
          %p383 = pneg %p159
        $region50: #{sentence_classification_forward.1} parent=35 // pred_check_branch
          %385 = sbr.rel (%p383) target = $region52
        $region51: #{sentence_classification_forward.1} parent=35 // pred_region
          %p386 = scmp.lt.s32.totalorder %s19, 1
          %s387 = scalar_select %p386, %s19, 1
          %s388 = smul.addr %s387, 4
          %s389 = smul.addr %s388, 8
          %s390 = scalar_lea.vmem %s5, %s389
        $region52: #{sentence_classification_forward.1} parent=35 // pred_fallthru
          _
        // Predicated region
        $region53: #{sentence_classification_forward.1} parent=35 // pred_check
          %p391 = pneg %p185
        $region54: #{sentence_classification_forward.1} parent=35 // pred_check_branch
          %393 = sbr.rel (%p391) target = $region56
        $region55: #{sentence_classification_forward.1} parent=35 // pred_region
          %p394 = scmp.lt.s32.totalorder %s19, 1
          %s395 = scalar_select %p394, %s19, 1
          %s396 = scalar_lea.vmem %s6, %s395
        $region56: #{sentence_classification_forward.1} parent=35 // pred_fallthru
          _
        // Predicated region
        $region57: #{sentence_classification_forward.1} parent=35 // pred_check
          %p397 = pneg %p211
        $region58: #{sentence_classification_forward.1} parent=35 // pred_check_branch
          %399 = sbr.rel (%p397) target = $region60
        $region59: #{sentence_classification_forward.1} parent=35 // pred_region
          %p400 = scmp.lt.s32.totalorder %s19, 1
          %s401 = scalar_select %p400, %s19, 1
          %s402 = smul.addr %s401, 8
          %s403 = smul.addr %s402, 8
          %s404 = scalar_lea.vmem %s7, %s403
        $region60: #{sentence_classification_forward.1} parent=35 // pred_fallthru
          _
        // Predicated region
        $region61: #{sentence_classification_forward.1} parent=35 // pred_check
          %p405 = pneg %p237
        $region62: #{sentence_classification_forward.1} parent=35 // pred_check_branch
          %407 = sbr.rel (%p405) target = $region64
        $region63: #{sentence_classification_forward.1} parent=35 // pred_region
          %p408 = scmp.lt.s32.totalorder %s19, 1
          %s409 = scalar_select %p408, %s19, 1
          %s410 = smul.addr %s409, 8
          %s411 = scalar_lea.vmem %s8, %s410
        $region64: #{sentence_classification_forward.1} parent=35 // pred_fallthru
          _
      $region36: #{sentence_classification_forward.1} parent=5 // pred_fallthru
        _
      %p412 = scmp.le.s32.totalorder 1, %s19
      %p413 = scmp.lt.s32.totalorder %s19, 3
      %p414 = pnand %p412, %p413
      %p415 = pneg %p414
      // Predicated region
      $region65: #{sentence_classification_forward.1} parent=5 // pred_check
        _
      $region66: #{sentence_classification_forward.1} parent=5 // pred_check_branch
        %417 = sbr.rel (%p414) target = $region68
      $region67: #{sentence_classification_forward.1} parent=5 // pred_region
        %s418 = ssub.s32 %s19, 1
        %p419 = pneg %p40
        %p420 = pneg %p37
        %p421 = pneg %p61
        %p422 = pneg %p58
        %p423 = scmp.lt.s32.totalorder %s24, 1
        %s424 = scalar_select %p423, %s24, 1
        %s425 = smul.addr %s424, 4
        %s426 = smul.addr %s425, 8
        %s427 = scalar_lea.vmem %s2, %s426
        %p428 = pneg %p87
        %p429 = pneg %p84
        %p430 = scmp.lt.s32.totalorder %s24, 1
        %s431 = scalar_select %p430, %s24, 1
        %s432 = scalar_lea.vmem %s3, %s431
        %p433 = pneg %p113
        %p434 = pneg %p110
        %p435 = scmp.lt.s32.totalorder %s24, 1
        %s436 = scalar_select %p435, %s24, 1
        %s437 = smul.addr %s436, 4
        %s438 = smul.addr %s437, 8
        %s439 = scalar_lea.vmem %s4, %s438
        %p440 = pneg %p139
        %p441 = pneg %p136
        %p442 = scmp.lt.s32.totalorder %s24, 1
        %s443 = scalar_select %p442, %s24, 1
        %s444 = smul.addr %s443, 4
        %s445 = smul.addr %s444, 8
        %s446 = scalar_lea.vmem %s5, %s445
        %p447 = pneg %p165
        %p448 = pneg %p162
        %p449 = scmp.lt.s32.totalorder %s24, 1
        %s450 = scalar_select %p449, %s24, 1
        %s451 = scalar_lea.vmem %s6, %s450
        %p452 = pneg %p191
        %p453 = pneg %p188
        %p454 = scmp.lt.s32.totalorder %s24, 1
        %s455 = scalar_select %p454, %s24, 1
        %s456 = smul.addr %s455, 8
        %s457 = smul.addr %s456, 8
        %s458 = scalar_lea.vmem %s7, %s457
        %p459 = pneg %p217
        %p460 = pneg %p214
        %p461 = scmp.lt.s32.totalorder %s24, 1
        %s462 = scalar_select %p461, %s24, 1
        %s463 = smul.addr %s462, 8
        %s464 = scalar_lea.vmem %s8, %s463
        %p465 = pneg %p243
        %p466 = pneg %p240
        %p467 = pneg %p264
        %p468 = pneg %p261
        %p469 = pneg %p285
        %p470 = pneg %p282
        %p471 = pneg %p306
        %p472 = pneg %p303
        %p473 = pneg %p327
        %p474 = pneg %p324
        %p475 = scmp.lt.s32.totalorder %s24, 1
        %s476 = scalar_select %p475, %s24, 1
        %s477 = smul.addr %s476, 4
        %s478 = smul.addr %s477, 8
        %s479 = scalar_lea.vmem %s2, %s478
        %p480 = scmp.lt.s32.totalorder %s24, 1
        %s481 = scalar_select %p480, %s24, 1
        %s482 = scalar_lea.vmem %s3, %s481
        %p483 = scmp.lt.s32.totalorder %s24, 1
        %s484 = scalar_select %p483, %s24, 1
        %s485 = smul.addr %s484, 4
        %s486 = smul.addr %s485, 8
        %s487 = scalar_lea.vmem %s4, %s486
        %p488 = scmp.lt.s32.totalorder %s24, 1
        %s489 = scalar_select %p488, %s24, 1
        %s490 = smul.addr %s489, 4
        %s491 = smul.addr %s490, 8
        %s492 = scalar_lea.vmem %s5, %s491
        %p493 = scmp.lt.s32.totalorder %s24, 1
        %s494 = scalar_select %p493, %s24, 1
        %s495 = scalar_lea.vmem %s6, %s494
        %p496 = scmp.lt.s32.totalorder %s24, 1
        %s497 = scalar_select %p496, %s24, 1
        %s498 = smul.addr %s497, 8
        %s499 = smul.addr %s498, 8
        %s500 = scalar_lea.vmem %s7, %s499
        %p501 = scmp.lt.s32.totalorder %s24, 1
        %s502 = scalar_select %p501, %s24, 1
        %s503 = smul.addr %s502, 8
        %s504 = scalar_lea.vmem %s8, %s503
        %p506 = scmp.eq.s32.totalorder %s24, 0
        // Predicated region
        $region69: #{sentence_classification_forward.1} parent=67 // pred_check
          %p507 = pneg %p506
        $region70: #{sentence_classification_forward.1} parent=67 // pred_check_branch
          %509 = sbr.rel (%p507) target = $region72
        $region71: #{sentence_classification_forward.1} parent=67 // pred_region
          %v510 = vld [vmem:[%s0] sm:$0xff]
          %v511 = vld [vmem:[%s0 + $0x8] sm:$0xff]
          %v512 = vld [vmem:[%s1] sm:$0x1]
          %v513 = vld [vmem:[%s1 + $0x1] sm:$0x1]
          %vm514 = vcmask 261120
          %v515 = vsel %vm514, %v510, 0.0
          %516 = vadd.xlane.f32.xlu0 %v515
          %v517 = vpop.xlane.xlu0 %516
          %v518 = vsel %vm514, %v511, 0.0
          %519 = vadd.xlane.f32.xlu0 %v518
          %v520 = vpop.xlane.xlu0 %519
          %v521 = vrcp.pop 32.0
          %v522 = vmul.f32 %v517, %v521
          %v523 = vmul.f32 %v520, %v521
          %v524 = vsub.f32 %v510, %v522
          %v525 = vsub.f32 %v511, %v523
          %v526 = vmul.f32 %v524, %v524
          %v527 = vmul.f32 %v525, %v525
          %v528 = vsel %vm514, %v526, 0.0
          %529 = vadd.xlane.f32.xlu0 %v528
          %v530 = vpop.xlane.xlu0 %529
          %v531 = vsel %vm514, %v527, 0.0
          %532 = vadd.xlane.f32.xlu0 %v531
          %v533 = vpop.xlane.xlu0 %532
          %v534 = vmul.f32 %v530, %v521
          %v535 = vmul.f32 %v533, %v521
          %v536 = vadd.f32 %v534, 1e-12
          %v537 = vadd.f32 %v535, 1e-12
          %v538 = vrsqrt.pop %v536
          %v539 = vrsqrt.pop %v537
          %v540 = vmul.f32 %v524, %v538
          %v541 = vmul.f32 %v525, %v539
          %v542 = vlaneseq
          %v543 = vshrl.u32 %v542, 7
          %v544 = vsub.s32 0, %v543
          %v545 = vrot.slane %v512, %v544
          %v546 = vmul.f32 %v540, %v545
          %v547 = vmul.f32 %v541, %v545
          %v548 = vlaneseq
          %v549 = vshrl.u32 %v548, 7
          %v550 = vsub.s32 0, %v549
          %v551 = vrot.slane %v513, %v550
          %v552 = vadd.f32 %v546, %v551
          %v553 = vadd.f32 %v547, %v551
          %554 = vst.msk [vmem:[#allocation2] sm:$0xff] %vm514, %v552
          %555 = vst.msk [vmem:[#allocation2 + $0x8] sm:$0xff] %vm514, %v553
        $region72: #{sentence_classification_forward.1} parent=67 // pred_fallthru
          _
        %v556 = vld [vmem:[#allocation2] sm:$0xff]
        %v557 = vld [vmem:[#allocation2 + $0x8] sm:$0xff]
        %v558 = vld [vmem:[%s479] sm:$0xff]
        %v559 = vld [vmem:[%s479 + $0x8] sm:$0xff]
        %v560 = vld [vmem:[%s479 + $0x10] sm:$0xff]
        %v561 = vld [vmem:[%s479 + $0x18] sm:$0xff]
        %v562 = vpack.c.bf16 %v557, %v556
        %v563 = vpack.c.bf16 %v559, %v558
        %v564 = vpack.c.bf16 %v561, %v560
        %v565 = vld [vmem:[%s482] sm:$0x1]
        %v567 = vlaneseq
        %v568 = vshrl.u32 %v567, 7
        %v569 = vsub.s32 0, %v568
        %v570 = vrot.slane %v565, %v569
        %vm572 = vcmask 261120
        %v574 = vsel %vm572, %v562, 0
        %576 = vmatprep.subr.bf16.mxu0 0
        %577 = vmatpush1.bf16.msra.mxu0 %v563
        %578 = vmatprep.subr.bf16.mxu0 0
        %579 = vmatpush1.bf16.msra.mxu0 %v564
        %580 = vmatprep.subr.bf16.mxu0 0
        %581 = vmatpush1.bf16.msra.mxu0 0
        %582 = vmatprep.subr.bf16.mxu0 0
        %583 = vmatpush1.bf16.msra.mxu0 0
        %584 = vmatprep.subr.bf16.mxu0 0
        %585 = vmatpush1.bf16.msra.mxu0 0
        %586 = vmatprep.subr.bf16.mxu0 0
        %587 = vmatpush1.bf16.msra.mxu0 0
        %588 = vmatprep.subr.bf16.mxu0 0
        %589 = vmatpush1.bf16.msra.mxu0 0
        %590 = vmatprep.subr.bf16.mxu0 0
        %591 = vmatpush1.bf16.msra.mxu0 0
        %592 = vmatprep.subr.bf16.mxu0 0
        %593 = vmatpush1.bf16.msra.mxu0 0
        %594 = vmatprep.subr.bf16.mxu0 0
        %595 = vmatpush1.bf16.msra.mxu0 0
        %596 = vmatprep.subr.bf16.mxu0 0
        %597 = vmatpush1.bf16.msra.mxu0 0
        %598 = vmatprep.subr.bf16.mxu0 0
        %599 = vmatpush1.bf16.msra.mxu0 0
        %600 = vmatprep.subr.bf16.mxu0 0
        %601 = vmatpush1.bf16.msra.mxu0 0
        %602 = vmatprep.subr.bf16.mxu0 0
        %603 = vmatpush1.bf16.msra.mxu0 0
        %604 = vmatprep.subr.bf16.mxu0 0
        %605 = vmatpush1.bf16.msra.mxu0 0
        %606 = vmatprep.subr.bf16.mxu0 0
        %607 = vmatpush1.bf16.msra.mxu0 0
        %608 = vmatprep.mubr.bf16.mxu0 0
        %609 = vmatmul.mubr.bf16.gmra.mrb[0].mxu0 %v574
        %v610 = vpop.f32.mrb[0].mxu0
        %v611 = vadd.f32 %v570, %v610
        %v612 = vpop.f32.mrb[0].mxu0
        %v613 = vpop.f32.mrb[0].mxu0
        %v614 = vadd.f32 %v570, %v613
        %v615 = vpop.f32.mrb[0].mxu0
        %616 = vdwg.mxu0
        %v617 = vmul.f32 %v611, 0.25
        %v618 = vmul.f32 %v614, 0.25
        %v619 = vpack.c.bf16 %v617, %v617
        %v620 = vpack.c.bf16 %v611, %v611
        %622 = vrot.lane.b32.xlu0 %v620, 96
        %v623 = vpop.permute.xlu0 %622
        %vm624 = vcmask 130048
        %v626 = vsel %vm624, %v619, 0
        %v629 = vsel %vm624, %v623, 0
        %631 = vmatprep.subr.bf16.mxu0 0
        %632 = vmatpush1.bf16.xpose.msra.mxu0 %v629
        %633 = vmatprep.subr.bf16.mxu0 0
        %634 = vmatpush1.bf16.xpose.msra.mxu0 0
        %635 = vmatprep.subr.bf16.mxu0 0
        %636 = vmatpush1.bf16.xpose.msra.mxu0 0
        %637 = vmatprep.subr.bf16.mxu0 0
        %638 = vmatpush1.bf16.xpose.msra.mxu0 0
        %639 = vmatprep.subr.bf16.mxu0 0
        %640 = vmatpush1.bf16.xpose.msra.mxu0 0
        %641 = vmatprep.subr.bf16.mxu0 0
        %642 = vmatpush1.bf16.xpose.msra.mxu0 0
        %643 = vmatprep.subr.bf16.mxu0 0
        %644 = vmatpush1.bf16.xpose.msra.mxu0 0
        %645 = vmatprep.subr.bf16.mxu0 0
        %646 = vmatpush1.bf16.xpose.msra.mxu0 0
        %647 = vmatprep.subr.bf16.mxu0 0
        %648 = vmatpush1.bf16.xpose.msra.mxu0 0
        %649 = vmatprep.subr.bf16.mxu0 0
        %650 = vmatpush1.bf16.xpose.msra.mxu0 0
        %651 = vmatprep.subr.bf16.mxu0 0
        %652 = vmatpush1.bf16.xpose.msra.mxu0 0
        %653 = vmatprep.subr.bf16.mxu0 0
        %654 = vmatpush1.bf16.xpose.msra.mxu0 0
        %655 = vmatprep.subr.bf16.mxu0 0
        %656 = vmatpush1.bf16.xpose.msra.mxu0 0
        %657 = vmatprep.subr.bf16.mxu0 0
        %658 = vmatpush1.bf16.xpose.msra.mxu0 0
        %659 = vmatprep.subr.bf16.mxu0 0
        %660 = vmatpush1.bf16.xpose.msra.mxu0 0
        %661 = vmatprep.subr.bf16.mxu0 0
        %662 = vmatpush1.bf16.xpose.msra.mxu0 0
        %663 = vmatprep.mubr.bf16.mxu0 0
        %664 = vmatmul.mubr.bf16.gmra.mrb[0].mxu0 %v626
        %v665 = vpop.f32.mrb[0].mxu0
        %v666 = vadd.f32 0.0, %v665
        %v667 = vpop.f32.mrb[0].mxu0
        %v668 = vpop.f32.mrb[0].mxu0
        %v669 = vpop.f32.mrb[0].mxu0
        %670 = vdwg.mxu0
        %vm671 = vcmask 64512
        %v672 = vsel %vm671, %v666, -inf
        %673 = vmax.xlane.f32.xlu0 %v672
        %v674 = vpop.xlane.xlu0 %673
        %v675 = vsub.f32 %v666, %v674
        %v676 = vmul.f32 %v675, 1.442695
        %v677 = vpow.pop %v676
        %v678 = vsel %vm671, %v677, 0.0
        %679 = vadd.xlane.f32.xlu0 %v678
        %v680 = vpop.xlane.xlu0 %679
        %v681 = vrcp.pop %v680
        %v682 = vmul.f32 %v677, %v681
        %v683 = vpack.c.bf16 %v682, %v682
        %684 = vrot.lane.b32.xlu0 %v620, 64
        %v685 = vpop.permute.xlu0 %684
        %v687 = vsel %vm671, %v683, 0
        %vm689 = vcmask 1043456
        %v691 = vsel %vm689, %v685, 0
        %693 = vmatprep.subr.bf16.mxu0 0
        %694 = vmatpush1.bf16.msra.mxu0 %v691
        %695 = vmatprep.subr.bf16.mxu0 0
        %696 = vmatpush1.bf16.msra.mxu0 0
        %697 = vmatprep.subr.bf16.mxu0 0
        %698 = vmatpush1.bf16.msra.mxu0 0
        %699 = vmatprep.subr.bf16.mxu0 0
        %700 = vmatpush1.bf16.msra.mxu0 0
        %701 = vmatprep.subr.bf16.mxu0 0
        %702 = vmatpush1.bf16.msra.mxu0 0
        %703 = vmatprep.subr.bf16.mxu0 0
        %704 = vmatpush1.bf16.msra.mxu0 0
        %705 = vmatprep.subr.bf16.mxu0 0
        %706 = vmatpush1.bf16.msra.mxu0 0
        %707 = vmatprep.subr.bf16.mxu0 0
        %708 = vmatpush1.bf16.msra.mxu0 0
        %709 = vmatprep.subr.bf16.mxu0 0
        %710 = vmatpush1.bf16.msra.mxu0 0
        %711 = vmatprep.subr.bf16.mxu0 0
        %712 = vmatpush1.bf16.msra.mxu0 0
        %713 = vmatprep.subr.bf16.mxu0 0
        %714 = vmatpush1.bf16.msra.mxu0 0
        %715 = vmatprep.subr.bf16.mxu0 0
        %716 = vmatpush1.bf16.msra.mxu0 0
        %717 = vmatprep.subr.bf16.mxu0 0
        %718 = vmatpush1.bf16.msra.mxu0 0
        %719 = vmatprep.subr.bf16.mxu0 0
        %720 = vmatpush1.bf16.msra.mxu0 0
        %721 = vmatprep.subr.bf16.mxu0 0
        %722 = vmatpush1.bf16.msra.mxu0 0
        %723 = vmatprep.subr.bf16.mxu0 0
        %724 = vmatpush1.bf16.msra.mxu0 0
        %725 = vmatprep.mubr.bf16.mxu0 0
        %726 = vmatmul.mubr.bf16.gmra.mrb[0].mxu0 %v687
        %v727 = vpop.f32.mrb[0].mxu0
        %v728 = vadd.f32 0.0, %v727
        %v729 = vpop.f32.mrb[0].mxu0
        %v730 = vpop.f32.mrb[0].mxu0
        %v731 = vpop.f32.mrb[0].mxu0
        %732 = vdwg.mxu0
        %734 = vrot.lane.b32.xlu0 %v619, 112
        %v735 = vpop.permute.xlu0 %734
        %736 = vrot.lane.b32.xlu0 %v620, 80
        %v737 = vpop.permute.xlu0 %736
        %v739 = vsel %vm624, %v735, 0
        %v742 = vsel %vm624, %v737, 0
        %744 = vmatprep.subr.bf16.mxu0 0
        %745 = vmatpush1.bf16.xpose.msra.mxu0 %v742
        %746 = vmatprep.subr.bf16.mxu0 0
        %747 = vmatpush1.bf16.xpose.msra.mxu0 0
        %748 = vmatprep.subr.bf16.mxu0 0
        %749 = vmatpush1.bf16.xpose.msra.mxu0 0
        %750 = vmatprep.subr.bf16.mxu0 0
        %751 = vmatpush1.bf16.xpose.msra.mxu0 0
        %752 = vmatprep.subr.bf16.mxu0 0
        %753 = vmatpush1.bf16.xpose.msra.mxu0 0
        %754 = vmatprep.subr.bf16.mxu0 0
        %755 = vmatpush1.bf16.xpose.msra.mxu0 0
        %756 = vmatprep.subr.bf16.mxu0 0
        %757 = vmatpush1.bf16.xpose.msra.mxu0 0
        %758 = vmatprep.subr.bf16.mxu0 0
        %759 = vmatpush1.bf16.xpose.msra.mxu0 0
        %760 = vmatprep.subr.bf16.mxu0 0
        %761 = vmatpush1.bf16.xpose.msra.mxu0 0
        %762 = vmatprep.subr.bf16.mxu0 0
        %763 = vmatpush1.bf16.xpose.msra.mxu0 0
        %764 = vmatprep.subr.bf16.mxu0 0
        %765 = vmatpush1.bf16.xpose.msra.mxu0 0
        %766 = vmatprep.subr.bf16.mxu0 0
        %767 = vmatpush1.bf16.xpose.msra.mxu0 0
        %768 = vmatprep.subr.bf16.mxu0 0
        %769 = vmatpush1.bf16.xpose.msra.mxu0 0
        %770 = vmatprep.subr.bf16.mxu0 0
        %771 = vmatpush1.bf16.xpose.msra.mxu0 0
        %772 = vmatprep.subr.bf16.mxu0 0
        %773 = vmatpush1.bf16.xpose.msra.mxu0 0
        %774 = vmatprep.subr.bf16.mxu0 0
        %775 = vmatpush1.bf16.xpose.msra.mxu0 0
        %776 = vmatprep.mubr.bf16.mxu0 0
        %777 = vmatmul.mubr.bf16.gmra.mrb[0].mxu0 %v739
        %v778 = vpop.f32.mrb[0].mxu0
        %v779 = vadd.f32 0.0, %v778
        %v780 = vpop.f32.mrb[0].mxu0
        %v781 = vpop.f32.mrb[0].mxu0
        %v782 = vpop.f32.mrb[0].mxu0
        %783 = vdwg.mxu0
        %v784 = vsel %vm671, %v779, -inf
        %785 = vmax.xlane.f32.xlu0 %v784
        %v786 = vpop.xlane.xlu0 %785
        %v787 = vsub.f32 %v779, %v786
        %v788 = vmul.f32 %v787, 1.442695
        %v789 = vpow.pop %v788
        %v790 = vsel %vm671, %v789, 0.0
        %791 = vadd.xlane.f32.xlu0 %v790
        %v792 = vpop.xlane.xlu0 %791
        %v793 = vrcp.pop %v792
        %v794 = vmul.f32 %v789, %v793
        %v795 = vpack.c.bf16 %v794, %v794
        %796 = vrot.lane.b32.xlu0 %v620, 48
        %v797 = vpop.permute.xlu0 %796
        %v799 = vsel %vm671, %v795, 0
        %v802 = vsel %vm689, %v797, 0
        %804 = vmatprep.subr.bf16.mxu0 0
        %805 = vmatpush1.bf16.msra.mxu0 %v802
        %806 = vmatprep.subr.bf16.mxu0 0
        %807 = vmatpush1.bf16.msra.mxu0 0
        %808 = vmatprep.subr.bf16.mxu0 0
        %809 = vmatpush1.bf16.msra.mxu0 0
        %810 = vmatprep.subr.bf16.mxu0 0
        %811 = vmatpush1.bf16.msra.mxu0 0
        %812 = vmatprep.subr.bf16.mxu0 0
        %813 = vmatpush1.bf16.msra.mxu0 0
        %814 = vmatprep.subr.bf16.mxu0 0
        %815 = vmatpush1.bf16.msra.mxu0 0
        %816 = vmatprep.subr.bf16.mxu0 0
        %817 = vmatpush1.bf16.msra.mxu0 0
        %818 = vmatprep.subr.bf16.mxu0 0
        %819 = vmatpush1.bf16.msra.mxu0 0
        %820 = vmatprep.subr.bf16.mxu0 0
        %821 = vmatpush1.bf16.msra.mxu0 0
        %822 = vmatprep.subr.bf16.mxu0 0
        %823 = vmatpush1.bf16.msra.mxu0 0
        %824 = vmatprep.subr.bf16.mxu0 0
        %825 = vmatpush1.bf16.msra.mxu0 0
        %826 = vmatprep.subr.bf16.mxu0 0
        %827 = vmatpush1.bf16.msra.mxu0 0
        %828 = vmatprep.subr.bf16.mxu0 0
        %829 = vmatpush1.bf16.msra.mxu0 0
        %830 = vmatprep.subr.bf16.mxu0 0
        %831 = vmatpush1.bf16.msra.mxu0 0
        %832 = vmatprep.subr.bf16.mxu0 0
        %833 = vmatpush1.bf16.msra.mxu0 0
        %834 = vmatprep.subr.bf16.mxu0 0
        %835 = vmatpush1.bf16.msra.mxu0 0
        %836 = vmatprep.mubr.bf16.mxu0 0
        %837 = vmatmul.mubr.bf16.gmra.mrb[0].mxu0 %v799
        %v838 = vpop.f32.mrb[0].mxu0
        %v839 = vadd.f32 0.0, %v838
        %v840 = vpop.f32.mrb[0].mxu0
        %v841 = vpop.f32.mrb[0].mxu0
        %v842 = vpop.f32.mrb[0].mxu0
        %843 = vdwg.mxu0
        %845 = vrot.lane.b32.xlu0 %v839, 16
        %v846 = vpop.permute.xlu0 %845
        %v848 = vsel %vm624, %v728, %v846
        %v849 = vpack.c.bf16 %v618, %v618
        %v850 = vpack.c.bf16 %v614, %v614
        %852 = vrot.lane.b32.xlu0 %v850, 96
        %v853 = vpop.permute.xlu0 %852
        %v855 = vsel %vm624, %v849, 0
        %v858 = vsel %vm624, %v853, 0
        %860 = vmatprep.subr.bf16.mxu0 0
        %861 = vmatpush1.bf16.xpose.msra.mxu0 %v858
        %862 = vmatprep.subr.bf16.mxu0 0
        %863 = vmatpush1.bf16.xpose.msra.mxu0 0
        %864 = vmatprep.subr.bf16.mxu0 0
        %865 = vmatpush1.bf16.xpose.msra.mxu0 0
        %866 = vmatprep.subr.bf16.mxu0 0
        %867 = vmatpush1.bf16.xpose.msra.mxu0 0
        %868 = vmatprep.subr.bf16.mxu0 0
        %869 = vmatpush1.bf16.xpose.msra.mxu0 0
        %870 = vmatprep.subr.bf16.mxu0 0
        %871 = vmatpush1.bf16.xpose.msra.mxu0 0
        %872 = vmatprep.subr.bf16.mxu0 0
        %873 = vmatpush1.bf16.xpose.msra.mxu0 0
        %874 = vmatprep.subr.bf16.mxu0 0
        %875 = vmatpush1.bf16.xpose.msra.mxu0 0
        %876 = vmatprep.subr.bf16.mxu0 0
        %877 = vmatpush1.bf16.xpose.msra.mxu0 0
        %878 = vmatprep.subr.bf16.mxu0 0
        %879 = vmatpush1.bf16.xpose.msra.mxu0 0
        %880 = vmatprep.subr.bf16.mxu0 0
        %881 = vmatpush1.bf16.xpose.msra.mxu0 0
        %882 = vmatprep.subr.bf16.mxu0 0
        %883 = vmatpush1.bf16.xpose.msra.mxu0 0
        %884 = vmatprep.subr.bf16.mxu0 0
        %885 = vmatpush1.bf16.xpose.msra.mxu0 0
        %886 = vmatprep.subr.bf16.mxu0 0
        %887 = vmatpush1.bf16.xpose.msra.mxu0 0
        %888 = vmatprep.subr.bf16.mxu0 0
        %889 = vmatpush1.bf16.xpose.msra.mxu0 0
        %890 = vmatprep.subr.bf16.mxu0 0
        %891 = vmatpush1.bf16.xpose.msra.mxu0 0
        %892 = vmatprep.mubr.bf16.mxu0 0
        %893 = vmatmul.mubr.bf16.gmra.mrb[0].mxu0 %v855
        %v894 = vpop.f32.mrb[0].mxu0
        %v895 = vadd.f32 0.0, %v894
        %v896 = vpop.f32.mrb[0].mxu0
        %v897 = vpop.f32.mrb[0].mxu0
        %v898 = vpop.f32.mrb[0].mxu0
        %899 = vdwg.mxu0
        %v900 = vsel %vm671, %v895, -inf
        %901 = vmax.xlane.f32.xlu0 %v900
        %v902 = vpop.xlane.xlu0 %901
        %v903 = vsub.f32 %v895, %v902
        %v904 = vmul.f32 %v903, 1.442695
        %v905 = vpow.pop %v904
        %v906 = vsel %vm671, %v905, 0.0
        %907 = vadd.xlane.f32.xlu0 %v906
        %v908 = vpop.xlane.xlu0 %907
        %v909 = vrcp.pop %v908
        %v910 = vmul.f32 %v905, %v909
        %v911 = vpack.c.bf16 %v910, %v910
        %912 = vrot.lane.b32.xlu0 %v850, 64
        %v913 = vpop.permute.xlu0 %912
        %v915 = vsel %vm671, %v911, 0
        %v918 = vsel %vm689, %v913, 0
        %920 = vmatprep.subr.bf16.mxu0 0
        %921 = vmatpush1.bf16.msra.mxu0 %v918
        %922 = vmatprep.subr.bf16.mxu0 0
        %923 = vmatpush1.bf16.msra.mxu0 0
        %924 = vmatprep.subr.bf16.mxu0 0
        %925 = vmatpush1.bf16.msra.mxu0 0
        %926 = vmatprep.subr.bf16.mxu0 0
        %927 = vmatpush1.bf16.msra.mxu0 0
        %928 = vmatprep.subr.bf16.mxu0 0
        %929 = vmatpush1.bf16.msra.mxu0 0
        %930 = vmatprep.subr.bf16.mxu0 0
        %931 = vmatpush1.bf16.msra.mxu0 0
        %932 = vmatprep.subr.bf16.mxu0 0
        %933 = vmatpush1.bf16.msra.mxu0 0
        %934 = vmatprep.subr.bf16.mxu0 0
        %935 = vmatpush1.bf16.msra.mxu0 0
        %936 = vmatprep.subr.bf16.mxu0 0
        %937 = vmatpush1.bf16.msra.mxu0 0
        %938 = vmatprep.subr.bf16.mxu0 0
        %939 = vmatpush1.bf16.msra.mxu0 0
        %940 = vmatprep.subr.bf16.mxu0 0
        %941 = vmatpush1.bf16.msra.mxu0 0
        %942 = vmatprep.subr.bf16.mxu0 0
        %943 = vmatpush1.bf16.msra.mxu0 0
        %944 = vmatprep.subr.bf16.mxu0 0
        %945 = vmatpush1.bf16.msra.mxu0 0
        %946 = vmatprep.subr.bf16.mxu0 0
        %947 = vmatpush1.bf16.msra.mxu0 0
        %948 = vmatprep.subr.bf16.mxu0 0
        %949 = vmatpush1.bf16.msra.mxu0 0
        %950 = vmatprep.subr.bf16.mxu0 0
        %951 = vmatpush1.bf16.msra.mxu0 0
        %952 = vmatprep.mubr.bf16.mxu0 0
        %953 = vmatmul.mubr.bf16.gmra.mrb[0].mxu0 %v915
        %v954 = vpop.f32.mrb[0].mxu0
        %v955 = vadd.f32 0.0, %v954
        %v956 = vpop.f32.mrb[0].mxu0
        %v957 = vpop.f32.mrb[0].mxu0
        %v958 = vpop.f32.mrb[0].mxu0
        %959 = vdwg.mxu0
        %961 = vrot.lane.b32.xlu0 %v849, 112
        %v962 = vpop.permute.xlu0 %961
        %963 = vrot.lane.b32.xlu0 %v850, 80
        %v964 = vpop.permute.xlu0 %963
        %v966 = vsel %vm624, %v962, 0
        %v969 = vsel %vm624, %v964, 0
        %971 = vmatprep.subr.bf16.mxu0 0
        %972 = vmatpush1.bf16.xpose.msra.mxu0 %v969
        %973 = vmatprep.subr.bf16.mxu0 0
        %974 = vmatpush1.bf16.xpose.msra.mxu0 0
        %975 = vmatprep.subr.bf16.mxu0 0
        %976 = vmatpush1.bf16.xpose.msra.mxu0 0
        %977 = vmatprep.subr.bf16.mxu0 0
        %978 = vmatpush1.bf16.xpose.msra.mxu0 0
        %979 = vmatprep.subr.bf16.mxu0 0
        %980 = vmatpush1.bf16.xpose.msra.mxu0 0
        %981 = vmatprep.subr.bf16.mxu0 0
        %982 = vmatpush1.bf16.xpose.msra.mxu0 0
        %983 = vmatprep.subr.bf16.mxu0 0
        %984 = vmatpush1.bf16.xpose.msra.mxu0 0
        %985 = vmatprep.subr.bf16.mxu0 0
        %986 = vmatpush1.bf16.xpose.msra.mxu0 0
        %987 = vmatprep.subr.bf16.mxu0 0
        %988 = vmatpush1.bf16.xpose.msra.mxu0 0
        %989 = vmatprep.subr.bf16.mxu0 0
        %990 = vmatpush1.bf16.xpose.msra.mxu0 0
        %991 = vmatprep.subr.bf16.mxu0 0
        %992 = vmatpush1.bf16.xpose.msra.mxu0 0
        %993 = vmatprep.subr.bf16.mxu0 0
        %994 = vmatpush1.bf16.xpose.msra.mxu0 0
        %995 = vmatprep.subr.bf16.mxu0 0
        %996 = vmatpush1.bf16.xpose.msra.mxu0 0
        %997 = vmatprep.subr.bf16.mxu0 0
        %998 = vmatpush1.bf16.xpose.msra.mxu0 0
        %999 = vmatprep.subr.bf16.mxu0 0
        %1000 = vmatpush1.bf16.xpose.msra.mxu0 0
        %1001 = vmatprep.subr.bf16.mxu0 0
        %1002 = vmatpush1.bf16.xpose.msra.mxu0 0
        %1003 = vmatprep.mubr.bf16.mxu0 0
        %1004 = vmatmul.mubr.bf16.gmra.mrb[0].mxu0 %v966
        %v1005 = vpop.f32.mrb[0].mxu0
        %v1006 = vadd.f32 0.0, %v1005
        %v1007 = vpop.f32.mrb[0].mxu0
        %v1008 = vpop.f32.mrb[0].mxu0
        %v1009 = vpop.f32.mrb[0].mxu0
        %1010 = vdwg.mxu0
        %v1011 = vsel %vm671, %v1006, -inf
        %1012 = vmax.xlane.f32.xlu0 %v1011
        %v1013 = vpop.xlane.xlu0 %1012
        %v1014 = vsub.f32 %v1006, %v1013
        %v1015 = vmul.f32 %v1014, 1.442695
        %v1016 = vpow.pop %v1015
        %v1017 = vsel %vm671, %v1016, 0.0
        %1018 = vadd.xlane.f32.xlu0 %v1017
        %v1019 = vpop.xlane.xlu0 %1018
        %v1020 = vrcp.pop %v1019
        %v1021 = vmul.f32 %v1016, %v1020
        %v1022 = vpack.c.bf16 %v1021, %v1021
        %1023 = vrot.lane.b32.xlu0 %v850, 48
        %v1024 = vpop.permute.xlu0 %1023
        %v1026 = vsel %vm671, %v1022, 0
        %v1029 = vsel %vm689, %v1024, 0
        %1031 = vmatprep.subr.bf16.mxu0 0
        %1032 = vmatpush1.bf16.msra.mxu0 %v1029
        %1033 = vmatprep.subr.bf16.mxu0 0
        %1034 = vmatpush1.bf16.msra.mxu0 0
        %1035 = vmatprep.subr.bf16.mxu0 0
        %1036 = vmatpush1.bf16.msra.mxu0 0
        %1037 = vmatprep.subr.bf16.mxu0 0
        %1038 = vmatpush1.bf16.msra.mxu0 0
        %1039 = vmatprep.subr.bf16.mxu0 0
        %1040 = vmatpush1.bf16.msra.mxu0 0
        %1041 = vmatprep.subr.bf16.mxu0 0
        %1042 = vmatpush1.bf16.msra.mxu0 0
        %1043 = vmatprep.subr.bf16.mxu0 0
        %1044 = vmatpush1.bf16.msra.mxu0 0
        %1045 = vmatprep.subr.bf16.mxu0 0
        %1046 = vmatpush1.bf16.msra.mxu0 0
        %1047 = vmatprep.subr.bf16.mxu0 0
        %1048 = vmatpush1.bf16.msra.mxu0 0
        %1049 = vmatprep.subr.bf16.mxu0 0
        %1050 = vmatpush1.bf16.msra.mxu0 0
        %1051 = vmatprep.subr.bf16.mxu0 0
        %1052 = vmatpush1.bf16.msra.mxu0 0
        %1053 = vmatprep.subr.bf16.mxu0 0
        %1054 = vmatpush1.bf16.msra.mxu0 0
        %1055 = vmatprep.subr.bf16.mxu0 0
        %1056 = vmatpush1.bf16.msra.mxu0 0
        %1057 = vmatprep.subr.bf16.mxu0 0
        %1058 = vmatpush1.bf16.msra.mxu0 0
        %1059 = vmatprep.subr.bf16.mxu0 0
        %1060 = vmatpush1.bf16.msra.mxu0 0
        %1061 = vmatprep.subr.bf16.mxu0 0
        %1062 = vmatpush1.bf16.msra.mxu0 0
        %1063 = vmatprep.mubr.bf16.mxu0 0
        %1064 = vmatmul.mubr.bf16.gmra.mrb[0].mxu0 %v1026
        %v1065 = vpop.f32.mrb[0].mxu0
        %v1066 = vadd.f32 0.0, %v1065
        %v1067 = vpop.f32.mrb[0].mxu0
        %v1068 = vpop.f32.mrb[0].mxu0
        %v1069 = vpop.f32.mrb[0].mxu0
        %1070 = vdwg.mxu0
        %1072 = vrot.lane.b32.xlu0 %v1066, 16
        %v1073 = vpop.permute.xlu0 %1072
        %v1075 = vsel %vm624, %v955, %v1073
        %v1076 = vld [vmem:[%s487] sm:$0xff]
        %v1077 = vld [vmem:[%s487 + $0x8] sm:$0xff]
        %v1078 = vld [vmem:[%s487 + $0x10] sm:$0xff]
        %v1079 = vld [vmem:[%s487 + $0x18] sm:$0xff]
        %v1080 = vpack.c.bf16 %v1075, %v848
        %v1081 = vpack.c.bf16 %v1077, %v1076
        %v1082 = vpack.c.bf16 %v1079, %v1078
        %v1083 = vld [vmem:[%s504] sm:$0x1]
        %v1084 = vlaneseq
        %v1085 = vshrl.u32 %v1084, 7
        %v1086 = vsub.s32 0, %v1085
        %v1087 = vrot.slane %v1083, %v1086
        %v1089 = vsel %vm572, %v1080, 0
        %1091 = vmatprep.subr.bf16.mxu0 0
        %1092 = vmatpush1.bf16.msra.mxu0 %v1081
        %1093 = vmatprep.subr.bf16.mxu0 0
        %1094 = vmatpush1.bf16.msra.mxu0 %v1082
        %1095 = vmatprep.subr.bf16.mxu0 0
        %1096 = vmatpush1.bf16.msra.mxu0 0
        %1097 = vmatprep.subr.bf16.mxu0 0
        %1098 = vmatpush1.bf16.msra.mxu0 0
        %1099 = vmatprep.subr.bf16.mxu0 0
        %1100 = vmatpush1.bf16.msra.mxu0 0
        %1101 = vmatprep.subr.bf16.mxu0 0
        %1102 = vmatpush1.bf16.msra.mxu0 0
        %1103 = vmatprep.subr.bf16.mxu0 0
        %1104 = vmatpush1.bf16.msra.mxu0 0
        %1105 = vmatprep.subr.bf16.mxu0 0
        %1106 = vmatpush1.bf16.msra.mxu0 0
        %1107 = vmatprep.subr.bf16.mxu0 0
        %1108 = vmatpush1.bf16.msra.mxu0 0
        %1109 = vmatprep.subr.bf16.mxu0 0
        %1110 = vmatpush1.bf16.msra.mxu0 0
        %1111 = vmatprep.subr.bf16.mxu0 0
        %1112 = vmatpush1.bf16.msra.mxu0 0
        %1113 = vmatprep.subr.bf16.mxu0 0
        %1114 = vmatpush1.bf16.msra.mxu0 0
        %1115 = vmatprep.subr.bf16.mxu0 0
        %1116 = vmatpush1.bf16.msra.mxu0 0
        %1117 = vmatprep.subr.bf16.mxu0 0
        %1118 = vmatpush1.bf16.msra.mxu0 0
        %1119 = vmatprep.subr.bf16.mxu0 0
        %1120 = vmatpush1.bf16.msra.mxu0 0
        %1121 = vmatprep.subr.bf16.mxu0 0
        %1122 = vmatpush1.bf16.msra.mxu0 0
        %1123 = vmatprep.mubr.bf16.mxu0 0
        %1124 = vmatmul.mubr.bf16.gmra.mrb[0].mxu0 %v1089
        %v1125 = vpop.f32.mrb[0].mxu0
        %v1126 = vadd.f32 %v1087, %v1125
        %v1127 = vpop.f32.mrb[0].mxu0
        %v1128 = vpop.f32.mrb[0].mxu0
        %v1129 = vadd.f32 %v1087, %v1128
        %v1130 = vpop.f32.mrb[0].mxu0
        %1131 = vdwg.mxu0
        %v1132 = vadd.f32 %v1126, %v556
        %v1133 = vadd.f32 %v1129, %v557
        %v1134 = vld [vmem:[%s504 + $0x1] sm:$0x1]
        %v1135 = vld [vmem:[%s504 + $0x2] sm:$0x1]
        %v1136 = vsel %vm572, %v1132, 0.0
        %1137 = vadd.xlane.f32.xlu0 %v1136
        %v1138 = vpop.xlane.xlu0 %1137
        %v1139 = vsel %vm572, %v1133, 0.0
        %1140 = vadd.xlane.f32.xlu0 %v1139
        %v1141 = vpop.xlane.xlu0 %1140
        %v1142 = vrcp.pop 32.0
        %v1143 = vmul.f32 %v1138, %v1142
        %v1144 = vmul.f32 %v1141, %v1142
        %v1145 = vsub.f32 %v1132, %v1143
        %v1146 = vsub.f32 %v1133, %v1144
        %v1147 = vmul.f32 %v1145, %v1145
        %v1148 = vmul.f32 %v1146, %v1146
        %v1149 = vsel %vm572, %v1147, 0.0
        %1150 = vadd.xlane.f32.xlu0 %v1149
        %v1151 = vpop.xlane.xlu0 %1150
        %v1152 = vsel %vm572, %v1148, 0.0
        %1153 = vadd.xlane.f32.xlu0 %v1152
        %v1154 = vpop.xlane.xlu0 %1153
        %v1155 = vmul.f32 %v1151, %v1142
        %v1156 = vmul.f32 %v1154, %v1142
        %v1157 = vadd.f32 %v1155, 1e-12
        %v1158 = vadd.f32 %v1156, 1e-12
        %v1159 = vrsqrt.pop %v1157
        %v1160 = vrsqrt.pop %v1158
        %v1161 = vmul.f32 %v1145, %v1159
        %v1162 = vmul.f32 %v1146, %v1160
        %v1163 = vlaneseq
        %v1164 = vshrl.u32 %v1163, 7
        %v1165 = vsub.s32 0, %v1164
        %v1166 = vrot.slane %v1134, %v1165
        %v1167 = vmul.f32 %v1161, %v1166
        %v1168 = vmul.f32 %v1162, %v1166
        %v1169 = vlaneseq
        %v1170 = vshrl.u32 %v1169, 7
        %v1171 = vsub.s32 0, %v1170
        %v1172 = vrot.slane %v1135, %v1171
        %v1173 = vadd.f32 %v1167, %v1172
        %v1174 = vadd.f32 %v1168, %v1172
        %v1175 = vld [vmem:[%s492] sm:$0xff]
        %v1176 = vld [vmem:[%s492 + $0x8] sm:$0xff]
        %v1177 = vld [vmem:[%s492 + $0x10] sm:$0xff]
        %v1178 = vld [vmem:[%s492 + $0x18] sm:$0xff]
        %v1179 = vpack.c.bf16 %v1174, %v1173
        %v1180 = vpack.c.bf16 %v1176, %v1175
        %v1181 = vpack.c.bf16 %v1178, %v1177
        %v1182 = vld [vmem:[%s495] sm:$0x1]
        %v1184 = vlaneseq
        %v1185 = vshrl.u32 %v1184, 7
        %v1186 = vsub.s32 0, %v1185
        %v1187 = vrot.slane %v1182, %v1186
        %v1190 = vsel %vm572, %v1179, 0
        %1192 = vmatprep.subr.bf16.mxu0 0
        %1193 = vmatpush1.bf16.msra.mxu0 %v1180
        %1194 = vmatprep.subr.bf16.mxu0 0
        %1195 = vmatpush1.bf16.msra.mxu0 %v1181
        %1196 = vmatprep.subr.bf16.mxu0 0
        %1197 = vmatpush1.bf16.msra.mxu0 0
        %1198 = vmatprep.subr.bf16.mxu0 0
        %1199 = vmatpush1.bf16.msra.mxu0 0
        %1200 = vmatprep.subr.bf16.mxu0 0
        %1201 = vmatpush1.bf16.msra.mxu0 0
        %1202 = vmatprep.subr.bf16.mxu0 0
        %1203 = vmatpush1.bf16.msra.mxu0 0
        %1204 = vmatprep.subr.bf16.mxu0 0
        %1205 = vmatpush1.bf16.msra.mxu0 0
        %1206 = vmatprep.subr.bf16.mxu0 0
        %1207 = vmatpush1.bf16.msra.mxu0 0
        %1208 = vmatprep.subr.bf16.mxu0 0
        %1209 = vmatpush1.bf16.msra.mxu0 0
        %1210 = vmatprep.subr.bf16.mxu0 0
        %1211 = vmatpush1.bf16.msra.mxu0 0
        %1212 = vmatprep.subr.bf16.mxu0 0
        %1213 = vmatpush1.bf16.msra.mxu0 0
        %1214 = vmatprep.subr.bf16.mxu0 0
        %1215 = vmatpush1.bf16.msra.mxu0 0
        %1216 = vmatprep.subr.bf16.mxu0 0
        %1217 = vmatpush1.bf16.msra.mxu0 0
        %1218 = vmatprep.subr.bf16.mxu0 0
        %1219 = vmatpush1.bf16.msra.mxu0 0
        %1220 = vmatprep.subr.bf16.mxu0 0
        %1221 = vmatpush1.bf16.msra.mxu0 0
        %1222 = vmatprep.subr.bf16.mxu0 0
        %1223 = vmatpush1.bf16.msra.mxu0 0
        %1224 = vmatprep.mubr.bf16.mxu0 0
        %1225 = vmatmul.mubr.bf16.gmra.mrb[0].mxu0 %v1190
        %v1226 = vpop.f32.mrb[0].mxu0
        %v1227 = vadd.f32 %v1187, %v1226
        %v1228 = vpop.f32.mrb[0].mxu0
        %v1229 = vpop.f32.mrb[0].mxu0
        %v1230 = vadd.f32 %v1187, %v1229
        %v1231 = vpop.f32.mrb[0].mxu0
        %1232 = vdwg.mxu0
        %v1233 = vmul.f32 %v1227, 0.5
        %v1234 = vmul.f32 %v1230, 0.5
        %v1235 = vmul.f32 %v1227, 0.70710677
        %v1236 = vmul.f32 %v1230, 0.70710677
        %v1237 = vand.u32 2147483647, %v1235
        %v1238 = vand.u32 2147483647, %v1236
        %v1239 = vmul.f32 %v1237, 0.3275911
        %v1240 = vmul.f32 %v1238, 0.3275911
        %v1241 = vadd.f32 %v1239, 1.0
        %v1242 = vadd.f32 %v1240, 1.0
        %v1243 = vrcp.pop %v1241
        %v1244 = vmul.f32 1.0, %v1243
        %v1245 = vrcp.pop %v1242
        %v1246 = vmul.f32 1.0, %v1245
        %v1247 = vmul.f32 %v1244, 1.0614054
        %v1248 = vmul.f32 %v1246, 1.0614054
        %v1249 = vadd.f32 %v1247, -1.4531521
        %v1250 = vadd.f32 %v1248, -1.4531521
        %v1251 = vmul.f32 %v1249, %v1244
        %v1252 = vmul.f32 %v1250, %v1246
        %v1253 = vadd.f32 %v1251, 1.4214138
        %v1254 = vadd.f32 %v1252, 1.4214138
        %v1255 = vmul.f32 %v1253, %v1244
        %v1256 = vmul.f32 %v1254, %v1246
        %v1257 = vadd.f32 %v1255, -0.28449672
        %v1258 = vadd.f32 %v1256, -0.28449672
        %v1259 = vmul.f32 %v1257, %v1244
        %v1260 = vmul.f32 %v1258, %v1246
        %v1261 = vadd.f32 %v1259, 0.2548296
        %v1262 = vadd.f32 %v1260, 0.2548296
        %v1263 = vmul.f32 %v1261, %v1244
        %v1264 = vmul.f32 %v1262, %v1246
        %v1265 = vsub.f32 0.0, %v1237
        %v1266 = vsub.f32 0.0, %v1238
        %v1267 = vmul.f32 %v1265, %v1237
        %v1268 = vmul.f32 %v1266, %v1238
        %v1269 = vmul.f32 %v1267, 1.442695
        %v1270 = vpow.pop %v1269
        %v1271 = vmul.f32 %v1268, 1.442695
        %v1272 = vpow.pop %v1271
        %v1273 = vmul.f32 %v1263, %v1270
        %v1274 = vmul.f32 %v1264, %v1272
        %v1275 = vsub.f32 1.0, %v1273
        %v1276 = vsub.f32 1.0, %v1274
        %vm1277 = vcmp.ge.f32.partialorder %v1235, 0.0
        %vm1278 = vcmp.ge.f32.partialorder %v1236, 0.0
        %v1279 = vsub.f32 0.0, %v1275
        %v1280 = vsub.f32 0.0, %v1276
        %v1281 = vsel %vm1277, %v1275, %v1279
        %v1282 = vsel %vm1278, %v1276, %v1280
        %v1283 = vadd.f32 %v1281, 1.0
        %v1284 = vadd.f32 %v1282, 1.0
        %v1285 = vmul.f32 %v1233, %v1283
        %v1286 = vmul.f32 %v1234, %v1284
        %v1287 = vld [vmem:[%s500] sm:$0xff]
        %v1288 = vld [vmem:[%s500 + $0x8] sm:$0xff]
        %v1289 = vld [vmem:[%s500 + $0x10] sm:$0xff]
        %v1290 = vld [vmem:[%s500 + $0x18] sm:$0xff]
        %v1291 = vld [vmem:[%s500 + $0x20] sm:$0xff]
        %v1292 = vld [vmem:[%s500 + $0x28] sm:$0xff]
        %v1293 = vld [vmem:[%s500 + $0x30] sm:$0xff]
        %v1294 = vld [vmem:[%s500 + $0x38] sm:$0xff]
        %v1295 = vpack.c.bf16 %v1286, %v1285
        %v1296 = vpack.c.bf16 %v1288, %v1287
        %v1297 = vpack.c.bf16 %v1290, %v1289
        %v1298 = vpack.c.bf16 %v1292, %v1291
        %v1299 = vpack.c.bf16 %v1294, %v1293
        %v1300 = vld [vmem:[%s504 + $0x3] sm:$0x1]
        %v1301 = vlaneseq
        %v1302 = vshrl.u32 %v1301, 7
        %v1303 = vsub.s32 0, %v1302
        %v1304 = vrot.slane %v1300, %v1303
        %vm1305 = vcmask 523264
        %v1307 = vsel %vm1305, %v1295, 0
        %1309 = vmatprep.subr.bf16.mxu0 0
        %1310 = vmatpush1.bf16.msra.mxu0 %v1296
        %1311 = vmatprep.subr.bf16.mxu0 0
        %1312 = vmatpush1.bf16.msra.mxu0 %v1297
        %1313 = vmatprep.subr.bf16.mxu0 0
        %1314 = vmatpush1.bf16.msra.mxu0 %v1298
        %1315 = vmatprep.subr.bf16.mxu0 0
        %1316 = vmatpush1.bf16.msra.mxu0 %v1299
        %1317 = vmatprep.subr.bf16.mxu0 0
        %1318 = vmatpush1.bf16.msra.mxu0 0
        %1319 = vmatprep.subr.bf16.mxu0 0
        %1320 = vmatpush1.bf16.msra.mxu0 0
        %1321 = vmatprep.subr.bf16.mxu0 0
        %1322 = vmatpush1.bf16.msra.mxu0 0
        %1323 = vmatprep.subr.bf16.mxu0 0
        %1324 = vmatpush1.bf16.msra.mxu0 0
        %1325 = vmatprep.subr.bf16.mxu0 0
        %1326 = vmatpush1.bf16.msra.mxu0 0
        %1327 = vmatprep.subr.bf16.mxu0 0
        %1328 = vmatpush1.bf16.msra.mxu0 0
        %1329 = vmatprep.subr.bf16.mxu0 0
        %1330 = vmatpush1.bf16.msra.mxu0 0
        %1331 = vmatprep.subr.bf16.mxu0 0
        %1332 = vmatpush1.bf16.msra.mxu0 0
        %1333 = vmatprep.subr.bf16.mxu0 0
        %1334 = vmatpush1.bf16.msra.mxu0 0
        %1335 = vmatprep.subr.bf16.mxu0 0
        %1336 = vmatpush1.bf16.msra.mxu0 0
        %1337 = vmatprep.subr.bf16.mxu0 0
        %1338 = vmatpush1.bf16.msra.mxu0 0
        %1339 = vmatprep.subr.bf16.mxu0 0
        %1340 = vmatpush1.bf16.msra.mxu0 0
        %1341 = vmatprep.mubr.bf16.mxu0 0
        %1342 = vmatmul.mubr.bf16.gmra.mrb[0].mxu0 %v1307
        %v1343 = vpop.f32.mrb[0].mxu0
        %v1344 = vadd.f32 %v1304, %v1343
        %v1345 = vpop.f32.mrb[0].mxu0
        %v1346 = vpop.f32.mrb[0].mxu0
        %v1347 = vadd.f32 %v1304, %v1346
        %v1348 = vpop.f32.mrb[0].mxu0
        %1349 = vdwg.mxu0
        %v1350 = vadd.f32 %v1344, %v1173
        %v1351 = vadd.f32 %v1347, %v1174
        %v1352 = vld [vmem:[%s504 + $0x4] sm:$0x1]
        %v1353 = vld [vmem:[%s504 + $0x5] sm:$0x1]
        %v1354 = vsel %vm572, %v1350, 0.0
        %1355 = vadd.xlane.f32.xlu0 %v1354
        %v1356 = vpop.xlane.xlu0 %1355
        %v1357 = vsel %vm572, %v1351, 0.0
        %1358 = vadd.xlane.f32.xlu0 %v1357
        %v1359 = vpop.xlane.xlu0 %1358
        %v1360 = vmul.f32 %v1356, %v1142
        %v1361 = vmul.f32 %v1359, %v1142
        %v1362 = vsub.f32 %v1350, %v1360
        %v1363 = vsub.f32 %v1351, %v1361
        %v1364 = vmul.f32 %v1362, %v1362
        %v1365 = vmul.f32 %v1363, %v1363
        %v1366 = vsel %vm572, %v1364, 0.0
        %1367 = vadd.xlane.f32.xlu0 %v1366
        %v1368 = vpop.xlane.xlu0 %1367
        %v1369 = vsel %vm572, %v1365, 0.0
        %1370 = vadd.xlane.f32.xlu0 %v1369
        %v1371 = vpop.xlane.xlu0 %1370
        %v1372 = vmul.f32 %v1368, %v1142
        %v1373 = vmul.f32 %v1371, %v1142
        %v1374 = vadd.f32 %v1372, 1e-12
        %v1375 = vadd.f32 %v1373, 1e-12
        %v1376 = vrsqrt.pop %v1374
        %v1377 = vrsqrt.pop %v1375
        %v1378 = vmul.f32 %v1362, %v1376
        %v1379 = vmul.f32 %v1363, %v1377
        %v1380 = vlaneseq
        %v1381 = vshrl.u32 %v1380, 7
        %v1382 = vsub.s32 0, %v1381
        %v1383 = vrot.slane %v1352, %v1382
        %v1384 = vmul.f32 %v1378, %v1383
        %v1385 = vmul.f32 %v1379, %v1383
        %v1386 = vlaneseq
        %v1387 = vshrl.u32 %v1386, 7
        %v1388 = vsub.s32 0, %v1387
        %v1389 = vrot.slane %v1353, %v1388
        %v1390 = vadd.f32 %v1384, %v1389
        %v1391 = vadd.f32 %v1385, %v1389
        %1392 = vst.msk [vmem:[#allocation2] sm:$0xff] %vm572, %v1390
        %1393 = vst.msk [vmem:[#allocation2 + $0x8] sm:$0xff] %vm572, %v1391
        %p1394 = scmp.eq.s32.totalorder %s24, 1
        // Predicated region
        $region73: #{sentence_classification_forward.1} parent=67 // pred_check
          %p1395 = pneg %p1394
        $region74: #{sentence_classification_forward.1} parent=67 // pred_check_branch
          %1397 = sbr.rel (%p1395) target = $region76
        $region75: #{sentence_classification_forward.1} parent=67 // pred_region
          %v1398 = vld [vmem:[#allocation2] sm:$0xff]
          %v1399 = vld [vmem:[#allocation2 + $0x8] sm:$0xff]
          %v1401 = vrot.slane %v1399, 7
          %vm1403 = vcmask 1040384
          %v1404 = vsel %vm1403, %v1398, %v1401
          %v1405 = vld [vmem:[%s9] sm:$0xff]
          %v1406 = vld [vmem:[%s9 + $0x8] sm:$0xff]
          %v1407 = vld [vmem:[%s9 + $0x10] sm:$0xff]
          %v1408 = vld [vmem:[%s9 + $0x18] sm:$0xff]
          %v1409 = vpack.c.bf16 %v1404, %v1404
          %v1410 = vpack.c.bf16 %v1406, %v1405
          %v1411 = vpack.c.bf16 %v1408, %v1407
          %v1412 = vld [vmem:[%s1 + $0x2] sm:$0x1]
          %v1413 = vlaneseq
          %v1414 = vshrl.u32 %v1413, 7
          %v1415 = vsub.s32 0, %v1414
          %v1416 = vrot.slane %v1412, %v1415
          %v1418 = vsel %vm572, %v1409, 0
          %1420 = vmatprep.subr.bf16.mxu0 0
          %1421 = vmatpush1.bf16.msra.mxu0 %v1410
          %1422 = vmatprep.subr.bf16.mxu0 0
          %1423 = vmatpush1.bf16.msra.mxu0 %v1411
          %1424 = vmatprep.subr.bf16.mxu0 0
          %1425 = vmatpush1.bf16.msra.mxu0 0
          %1426 = vmatprep.subr.bf16.mxu0 0
          %1427 = vmatpush1.bf16.msra.mxu0 0
          %1428 = vmatprep.subr.bf16.mxu0 0
          %1429 = vmatpush1.bf16.msra.mxu0 0
          %1430 = vmatprep.subr.bf16.mxu0 0
          %1431 = vmatpush1.bf16.msra.mxu0 0
          %1432 = vmatprep.subr.bf16.mxu0 0
          %1433 = vmatpush1.bf16.msra.mxu0 0
          %1434 = vmatprep.subr.bf16.mxu0 0
          %1435 = vmatpush1.bf16.msra.mxu0 0
          %1436 = vmatprep.subr.bf16.mxu0 0
          %1437 = vmatpush1.bf16.msra.mxu0 0
          %1438 = vmatprep.subr.bf16.mxu0 0
          %1439 = vmatpush1.bf16.msra.mxu0 0
          %1440 = vmatprep.subr.bf16.mxu0 0
          %1441 = vmatpush1.bf16.msra.mxu0 0
          %1442 = vmatprep.subr.bf16.mxu0 0
          %1443 = vmatpush1.bf16.msra.mxu0 0
          %1444 = vmatprep.subr.bf16.mxu0 0
          %1445 = vmatpush1.bf16.msra.mxu0 0
          %1446 = vmatprep.subr.bf16.mxu0 0
          %1447 = vmatpush1.bf16.msra.mxu0 0
          %1448 = vmatprep.subr.bf16.mxu0 0
          %1449 = vmatpush1.bf16.msra.mxu0 0
          %1450 = vmatprep.subr.bf16.mxu0 0
          %1451 = vmatpush1.bf16.msra.mxu0 0
          %1452 = vmatprep.mubr.bf16.mxu0 0
          %1453 = vmatmul.mubr.bf16.gmra.mrb[0].mxu0 %v1418
          %v1454 = vpop.f32.mrb[0].mxu0
          %v1455 = vadd.f32 %v1416, %v1454
          %v1456 = vpop.f32.mrb[0].mxu0
          %v1457 = vpop.f32.mrb[0].mxu0
          %v1458 = vpop.f32.mrb[0].mxu0
          %1459 = vdwg.mxu0
          %v1460 = vtanh.pop %v1455
          %v1461 = vld [vmem:[%s10] sm:$0xff]
          %v1462 = vld [vmem:[%s10 + $0x8] sm:$0xff]
          %v1463 = vld [vmem:[%s10 + $0x10] sm:$0xff]
          %v1464 = vld [vmem:[%s10 + $0x18] sm:$0xff]
          %v1465 = vpack.c.bf16 %v1460, %v1460
          %v1466 = vpack.c.bf16 %v1462, %v1461
          %v1467 = vpack.c.bf16 %v1464, %v1463
          %v1468 = vld [vmem:[%s11] sm:$0x1]
          %v1470 = vlaneseq
          %v1471 = vshrl.u32 %v1470, 7
          %v1472 = vsub.s32 0, %v1471
          %v1473 = vrot.slane %v1468, %v1472
          %v1476 = vsel %vm572, %v1465, 0
          %1478 = vmatprep.subr.bf16.mxu0 0
          %1479 = vmatpush1.bf16.msra.mxu0 %v1466
          %1480 = vmatprep.subr.bf16.mxu0 0
          %1481 = vmatpush1.bf16.msra.mxu0 %v1467
          %1482 = vmatprep.subr.bf16.mxu0 0
          %1483 = vmatpush1.bf16.msra.mxu0 0
          %1484 = vmatprep.subr.bf16.mxu0 0
          %1485 = vmatpush1.bf16.msra.mxu0 0
          %1486 = vmatprep.subr.bf16.mxu0 0
          %1487 = vmatpush1.bf16.msra.mxu0 0
          %1488 = vmatprep.subr.bf16.mxu0 0
          %1489 = vmatpush1.bf16.msra.mxu0 0
          %1490 = vmatprep.subr.bf16.mxu0 0
          %1491 = vmatpush1.bf16.msra.mxu0 0
          %1492 = vmatprep.subr.bf16.mxu0 0
          %1493 = vmatpush1.bf16.msra.mxu0 0
          %1494 = vmatprep.subr.bf16.mxu0 0
          %1495 = vmatpush1.bf16.msra.mxu0 0
          %1496 = vmatprep.subr.bf16.mxu0 0
          %1497 = vmatpush1.bf16.msra.mxu0 0
          %1498 = vmatprep.subr.bf16.mxu0 0
          %1499 = vmatpush1.bf16.msra.mxu0 0
          %1500 = vmatprep.subr.bf16.mxu0 0
          %1501 = vmatpush1.bf16.msra.mxu0 0
          %1502 = vmatprep.subr.bf16.mxu0 0
          %1503 = vmatpush1.bf16.msra.mxu0 0
          %1504 = vmatprep.subr.bf16.mxu0 0
          %1505 = vmatpush1.bf16.msra.mxu0 0
          %1506 = vmatprep.subr.bf16.mxu0 0
          %1507 = vmatpush1.bf16.msra.mxu0 0
          %1508 = vmatprep.subr.bf16.mxu0 0
          %1509 = vmatpush1.bf16.msra.mxu0 0
          %1510 = vmatprep.mubr.bf16.mxu0 0
          %1511 = vmatmul.mubr.bf16.gmra.mrb[0].mxu0 %v1476
          %v1512 = vpop.f32.mrb[0].mxu0
          %v1513 = vadd.f32 %v1473, %v1512
          %v1514 = vpop.f32.mrb[0].mxu0
          %v1515 = vpop.f32.mrb[0].mxu0
          %v1516 = vpop.f32.mrb[0].mxu0
          %1517 = vdwg.mxu0
          %vm1518 = vcmask 9216
          %1519 = vst.msk [vmem:[#allocation3] sm:$0x3] %vm1518, %v1513
        $region76: #{sentence_classification_forward.1} parent=67 // pred_fallthru
          _
        // Predicated region
        $region77: #{sentence_classification_forward.1} parent=67 // pred_check
          %p1520 = pneg %p324
        $region78: #{sentence_classification_forward.1} parent=67 // pred_check_branch
          %1522 = sbr.rel (%p1520) target = $region80
        $region79: #{sentence_classification_forward.1} parent=67 // pred_region
          %s1524 = ssub.s32 32, 32
          %1525 = vsyncadd [#allocation4], %s1524
          %s1527 = sshll.u32 [#allocation3], 4
          %s1528 = int_to_ptr.vmem [resolvable:$true] %s1527
          %1530 = dma.vmem_to_hbm [thread:$0]  %s1528, 32, %s12, [#allocation4]
        $region80: #{sentence_classification_forward.1} parent=67 // pred_fallthru
          _
        // Predicated region
        $region81: #{sentence_classification_forward.1} parent=67 // pred_check
          %p1531 = pneg %p324
        $region82: #{sentence_classification_forward.1} parent=67 // pred_check_branch
          %1533 = sbr.rel (%p1531) target = $region84
        $region83: #{sentence_classification_forward.1} parent=67 // pred_region
          %1534 = dma.done [#allocation4], 32
        $region84: #{sentence_classification_forward.1} parent=67 // pred_fallthru
          _
      $region68: #{sentence_classification_forward.1} parent=5 // pred_fallthru
        _
      %p1535 = scmp.le.s32.totalorder 2, %s19
      // Predicated region
      $region85: #{sentence_classification_forward.1} parent=5 // pred_check
        %p1536 = pneg %p1535
      $region86: #{sentence_classification_forward.1} parent=5 // pred_check_branch
        %1538 = sbr.rel (%p1536) target = $region88
      $region87: #{sentence_classification_forward.1} parent=5 // pred_region
        %s1539 = ssub.s32 %s19, 2
      $region88: #{sentence_classification_forward.1} parent=5 // pred_fallthru
        _
    $region6: #{sentence_classification_forward.1} parent=1 // loop_footer
      %s23 = sadd.s32 1, %s19
    $region7: #{sentence_classification_forward.1} parent=1 // loop_footer_branch
      %18 = sbr.rel target = $region3
    $region8: #{sentence_classification_forward.1} parent=1 // loop_exit
      _
    %1540 = vsyncpa [#allocation4], 1
    %s1541 = scalar_lea.sflag [#allocation4], 1
    %1542 = vsyncpa %s1541, 1

</llo_original>
